<compile_context>
chip_gen: v7x
topology: tpu7x:2x2x1
jax: 0.10.0
libtpu: 0.0.40
codegen_flags: <defaults>
</compile_context>

<pallas_src>
import functools

import jax
import jax.numpy as jnp
from jax.experimental import pallas as pl
from jax.experimental.pallas import tpu as pltpu


def _round_up(n, m):
    return ((n + m - 1) // m) * m


def _make_mlp_kernel(num_linear, activation):
    """Kernel for `num_linear` linear layers; activation after all but the last.

    Ref order: (x_ref, w0, b0, w1, b1, ..., w_{L-1}, b_{L-1}, o_ref).
    x / weights are bf16 (MXU-native inputs), biases f32, accumulation f32.
    """
    def kernel(x_ref, *refs):
        o_ref = refs[-1]
        h = x_ref[...]                              # bf16 (TB, K0_pad)
        for l in range(num_linear):
            w = refs[2 * l][...]                    # bf16 (K_pad, N_pad), VMEM-resident
            b = refs[2 * l + 1][...]                # f32  (1, N_pad)
            acc = jnp.dot(h, w, preferred_element_type=jnp.float32) + b
            if l < num_linear - 1:
                h = activation(acc).astype(jnp.bfloat16)
            else:
                o_ref[...] = acc.astype(o_ref.dtype)
    return kernel


def _choose_batch_tiling(batch, block_b):
    """Pick (tb, num_tiles) with tb a multiple of 16 and an even grid when >1 tile.

    Small batches -> a single grid step (fewest-tiles rule for v5e/v6e); larger
    batches -> an even number of tiles so the parallel batch axis can shard
    across both TensorCores on v7x.
    """
    num_tiles = pl.cdiv(batch, block_b)
    if num_tiles > 1 and num_tiles % 2 == 1:
        num_tiles += 1
    tb = _round_up(pl.cdiv(batch, num_tiles), 16)
    return tb, num_tiles


def _pad2d(a, shape, dtype):
    """Cast to dtype; zero-pad trailing rows/cols only if actually needed."""
    a = a.astype(dtype)
    pad = tuple((0, t - s) for s, t in zip(a.shape, shape))
    if any(p[1] for p in pad):
        a = jnp.pad(a, pad)
    return a


def neural_network_forward(x, params, *, activation=jnp.tanh, block_b=512):
    """Forward pass of the sequential MLP.

    x:      (B, input_size) float32
    params: list of (w, b) with w: (fan_in, fan_out) float32, b: (fan_out,) float32
    returns (B, output_size) float32
    """
    B, in_features = x.shape
    num_linear = len(params)
    out_features = params[-1][0].shape[1]

    # ---- pad all feature dims to multiples of 128 (zero padding is exact) ----
    dims = [in_features] + [w.shape[1] for (w, _) in params]
    pdims = [_round_up(d, 128) for d in dims]

    # ---- batch tiling: 16-aligned tiles, even grid length when >1 tile ----
    tb, num_tiles = _choose_batch_tiling(B, block_b)
    b_pad = tb * num_tiles

    x_p = _pad2d(x, (b_pad, pdims[0]), jnp.bfloat16)

    padded_params = []
    for l, (w, b) in enumerate(params):
        w_p = _pad2d(w, (pdims[l], pdims[l + 1]), jnp.bfloat16)
        b_p = _pad2d(b.reshape(1, -1), (1, pdims[l + 1]), jnp.float32)
        padded_params.append((w_p, b_p))

    grid = (num_tiles,)

    # x / output tiled over batch (double-buffered by the pipeline); weights &
    # biases use constant index_maps + single buffering so they are loaded once
    # and stay resident in VMEM across all grid steps.
    in_specs = [pl.BlockSpec((tb, pdims[0]), lambda i: (i, 0))]
    operands = [x_p]
    for (w_p, b_p) in padded_params:
        in_specs.append(pl.BlockSpec(w_p.shape, lambda i: (0, 0),
                                     pipeline_mode=pl.Buffered(1)))
        in_specs.append(pl.BlockSpec(b_p.shape, lambda i: (0, 0),
                                     pipeline_mode=pl.Buffered(1)))
        operands.extend([w_p, b_p])

    out_specs = pl.BlockSpec((tb, pdims[-1]), lambda i: (i, 0))   # lane-dense output
    out_shape = jax.ShapeDtypeStruct((b_pad, pdims[-1]), jnp.float32)

    # ---- explicit VMEM budget: working set x2 margin, within physical limits ----
    vmem_need = (
        2 * tb * pdims[0] * 2                                   # x tile, 2 buffers
        + 2 * tb * pdims[-1] * 4                                # out tile, 2 buffers
        + sum(w.size * 2 + max(b.size, 8 * 128) * 4             # resident W/b, 1 buffer
              for (w, b) in padded_params)
    )
    vmem_limit = min(max(2 * vmem_need + (1 << 20), 16 << 20), 64 << 20)

    y_pad = pl.pallas_call(
        _make_mlp_kernel(num_linear, activation),
        grid=grid,
        in_specs=in_specs,
        out_specs=out_specs,
        out_shape=out_shape,
        compiler_params=pltpu.CompilerParams(
            dimension_semantics=("parallel",),    # batch tiles shard across TCs on v7x
            vmem_limit_bytes=vmem_limit),
    )(*operands)

    return y_pad[:B, :out_features]


def init_params(key, input_size, hidden_size, output_size, num_layers):
    """PyTorch nn.Linear default init: uniform(+/- 1/sqrt(fan_in)) for W and b."""
    sizes = [input_size] + [hidden_size] * num_layers + [output_size]
    params = []
    for fan_in, fan_out in zip(sizes[:-1], sizes[1:]):
        key, kw, kb = jax.random.split(key, 3)
        bound = float(fan_in) ** -0.5
        w = jax.random.uniform(kw, (fan_in, fan_out), jnp.float32, -bound, bound)
        b = jax.random.uniform(kb, (fan_out,), jnp.float32, -bound, bound)
        params.append((w, b))
    return params


def _reference(x, params):
    """Plain-JAX reference with the same bf16 matmul inputs / fp32 accumulation."""
    h = x
    for i, (w, b) in enumerate(params):
        acc = jnp.dot(h.astype(jnp.bfloat16), w.astype(jnp.bfloat16),
                      preferred_element_type=jnp.float32) + b
        h = jnp.tanh(acc) if i < len(params) - 1 else acc
    return h


if __name__ == "__main__":
    # Config matching the module: input_size=200, hidden_size=100, output_size=1,
    # num_layers=2, activation=tanh.
    INPUT, HIDDEN, OUTPUT, NUM_LAYERS = 200, 100, 1, 2
    B = 1024   # block_b=512 -> even grid=(2,): exercises the pipelined batch grid

    key = jax.random.PRNGKey(0)
    k_params, k_x = jax.random.split(key)
    params = init_params(k_params, INPUT, HIDDEN, OUTPUT, NUM_LAYERS)
    x = jax.random.normal(k_x, (B, INPUT), jnp.float32)

    fwd = jax.jit(functools.partial(neural_network_forward, block_b=512))
    out = fwd(x, params)
    jax.block_until_ready(out)

    ref = _reference(x, params)

    assert out.shape == (B, OUTPUT), out.shape
    assert jnp.allclose(out, ref, atol=2e-3, rtol=2e-3), \
        float(jnp.max(jnp.abs(out - ref)))

    # Also exercise the single-tile (small batch) path.
    x_small = x[:48]
    out_small = jax.jit(neural_network_forward)(x_small, params)
    jax.block_until_ready(out_small)
    assert out_small.shape == (48, OUTPUT)
    assert jnp.allclose(out_small, ref[:48], atol=2e-3, rtol=2e-3)

    print("KERNEL_OK")
</pallas_src>

<mosaic_0001>
module attributes {stable_mosaic.version = 11 : i64} {
  func.func @kernel(%arg0: i32, %arg1: memref<512x256xbf16, #tpu.memory_space<vmem>>, %arg2: memref<256x128xbf16, #tpu.memory_space<vmem>>, %arg3: memref<1x128xf32, #tpu.memory_space<vmem>>, %arg4: memref<128x128xbf16, #tpu.memory_space<vmem>>, %arg5: memref<1x128xf32, #tpu.memory_space<vmem>>, %arg6: memref<128x128xbf16, #tpu.memory_space<vmem>>, %arg7: memref<1x128xf32, #tpu.memory_space<vmem>>, %arg8: memref<512x128xf32, #tpu.memory_space<vmem>>) attributes {dimension_semantics = [#tpu.dimension_semantics<parallel>], iteration_bounds = array<i64: 2>, scalar_prefetch = 0 : i64, scratch_operands = 0 : i64, tpu.core_type = #tpu.core_type<tc>, window_params = [{transform_indices = @transform_0, window_bounds = array<i64: 512, 256>}, {pipeline_mode = #tpu.pipeline_mode<synchronous>, transform_indices = @transform_1, window_bounds = array<i64: 256, 128>}, {pipeline_mode = #tpu.pipeline_mode<synchronous>, transform_indices = @transform_2, window_bounds = array<i64: 1, 128>}, {pipeline_mode = #tpu.pipeline_mode<synchronous>, transform_indices = @transform_3, window_bounds = array<i64: 128, 128>}, {pipeline_mode = #tpu.pipeline_mode<synchronous>, transform_indices = @transform_4, window_bounds = array<i64: 1, 128>}, {pipeline_mode = #tpu.pipeline_mode<synchronous>, transform_indices = @transform_5, window_bounds = array<i64: 128, 128>}, {pipeline_mode = #tpu.pipeline_mode<synchronous>, transform_indices = @transform_6, window_bounds = array<i64: 1, 128>}, {transform_indices = @transform_7, window_bounds = array<i64: 512, 128>}]} {
    %c0 = arith.constant 0 : index
    %c0_0 = arith.constant 0 : index
    %0 = vector.load %arg1[%c0, %c0_0] : memref<512x256xbf16, #tpu.memory_space<vmem>>, vector<512x256xbf16>
    %c0_1 = arith.constant 0 : index
    %c0_2 = arith.constant 0 : index
    %1 = vector.load %arg2[%c0_1, %c0_2] : memref<256x128xbf16, #tpu.memory_space<vmem>>, vector<256x128xbf16>
    %c0_3 = arith.constant 0 : index
    %c0_4 = arith.constant 0 : index
    %2 = vector.load %arg3[%c0_3, %c0_4] : memref<1x128xf32, #tpu.memory_space<vmem>>, vector<1x128xf32>
    %cst = arith.constant dense<0.000000e+00> : vector<512x128xf32>
    %3 = tpu.matmul %0, %1, %cst {dimension_numbers = #tpu.dot_dimension_numbers<[1], [0], [0], [1], [0, 0, 1, 1], [], []>} : vector<512x256xbf16>, vector<256x128xbf16>, vector<512x128xf32> -> vector<512x128xf32>
    %4 = vector.broadcast %2 : vector<1x128xf32> to vector<512x128xf32>
    %5 = arith.addf %3, %4 : vector<512x128xf32>
    %6 = math.tanh %5 : vector<512x128xf32>
    %7 = arith.truncf %6 : vector<512x128xf32> to vector<512x128xbf16>
    %c0_5 = arith.constant 0 : index
    %c0_6 = arith.constant 0 : index
    %8 = vector.load %arg4[%c0_5, %c0_6] : memref<128x128xbf16, #tpu.memory_space<vmem>>, vector<128x128xbf16>
    %c0_7 = arith.constant 0 : index
    %c0_8 = arith.constant 0 : index
    %9 = vector.load %arg5[%c0_7, %c0_8] : memref<1x128xf32, #tpu.memory_space<vmem>>, vector<1x128xf32>
    %cst_9 = arith.constant dense<0.000000e+00> : vector<512x128xf32>
    %10 = tpu.matmul %7, %8, %cst_9 {dimension_numbers = #tpu.dot_dimension_numbers<[1], [0], [0], [1], [0, 0, 1, 1], [], []>} : vector<512x128xbf16>, vector<128x128xbf16>, vector<512x128xf32> -> vector<512x128xf32>
    %11 = vector.broadcast %9 : vector<1x128xf32> to vector<512x128xf32>
    %12 = arith.addf %10, %11 : vector<512x128xf32>
    %13 = math.tanh %12 : vector<512x128xf32>
    %14 = arith.truncf %13 : vector<512x128xf32> to vector<512x128xbf16>
    %c0_10 = arith.constant 0 : index
    %c0_11 = arith.constant 0 : index
    %15 = vector.load %arg6[%c0_10, %c0_11] : memref<128x128xbf16, #tpu.memory_space<vmem>>, vector<128x128xbf16>
    %c0_12 = arith.constant 0 : index
    %c0_13 = arith.constant 0 : index
    %16 = vector.load %arg7[%c0_12, %c0_13] : memref<1x128xf32, #tpu.memory_space<vmem>>, vector<1x128xf32>
    %cst_14 = arith.constant dense<0.000000e+00> : vector<512x128xf32>
    %17 = tpu.matmul %14, %15, %cst_14 {dimension_numbers = #tpu.dot_dimension_numbers<[1], [0], [0], [1], [0, 0, 1, 1], [], []>} : vector<512x128xbf16>, vector<128x128xbf16>, vector<512x128xf32> -> vector<512x128xf32>
    %18 = vector.broadcast %16 : vector<1x128xf32> to vector<512x128xf32>
    %19 = arith.addf %17, %18 : vector<512x128xf32>
    %c0_15 = arith.constant 0 : index
    %c0_16 = arith.constant 0 : index
    %20 = vector.load %arg8[%c0_15, %c0_16] : memref<512x128xf32, #tpu.memory_space<vmem>>, vector<512x128xf32>
    tpu.vector_store %arg8[%c0_15, %c0_16], %19 {strides = array<i32>} : memref<512x128xf32, #tpu.memory_space<vmem>>, vector<512x128xf32>,
    return
  }
  func.func @transform_0(%arg0: i32) -> (i32, i32) {
    %c0_i32 = arith.constant 0 : i32
    %c0_i32_0 = arith.constant 0 : i32
    return %arg0, %c0_i32 : i32, i32
  }
  func.func @transform_1(%arg0: i32) -> (i32, i32) {
    %c0_i32 = arith.constant 0 : i32
    %c0_i32_0 = arith.constant 0 : i32
    %c0_i32_1 = arith.constant 0 : i32
    return %c0_i32, %c0_i32_0 : i32, i32
  }
  func.func @transform_2(%arg0: i32) -> (i32, i32) {
    %c0_i32 = arith.constant 0 : i32
    %c0_i32_0 = arith.constant 0 : i32
    %c0_i32_1 = arith.constant 0 : i32
    return %c0_i32, %c0_i32_0 : i32, i32
  }
  func.func @transform_3(%arg0: i32) -> (i32, i32) {
    %c0_i32 = arith.constant 0 : i32
    %c0_i32_0 = arith.constant 0 : i32
    %c0_i32_1 = arith.constant 0 : i32
    return %c0_i32, %c0_i32_0 : i32, i32
  }
  func.func @transform_4(%arg0: i32) -> (i32, i32) {
    %c0_i32 = arith.constant 0 : i32
    %c0_i32_0 = arith.constant 0 : i32
    %c0_i32_1 = arith.constant 0 : i32
    return %c0_i32, %c0_i32_0 : i32, i32
  }
  func.func @transform_5(%arg0: i32) -> (i32, i32) {
    %c0_i32 = arith.constant 0 : i32
    %c0_i32_0 = arith.constant 0 : i32
    %c0_i32_1 = arith.constant 0 : i32
    return %c0_i32, %c0_i32_0 : i32, i32
  }
  func.func @transform_6(%arg0: i32) -> (i32, i32) {
    %c0_i32 = arith.constant 0 : i32
    %c0_i32_0 = arith.constant 0 : i32
    %c0_i32_1 = arith.constant 0 : i32
    return %c0_i32, %c0_i32_0 : i32, i32
  }
  func.func @transform_7(%arg0: i32) -> (i32, i32) {
    %c0_i32 = arith.constant 0 : i32
    %c0_i32_0 = arith.constant 0 : i32
    return %arg0, %c0_i32 : i32, i32
  }
}

</mosaic_0001>

<llo_original>
// kernel: neural_network_forward.1
$region0: #{neural_network_forward.1}
  #allocation0 [shape = 'u32[]', space=smem, size = 0x4, offset = 0x4, fixed_abs, tag = 'smem constant byte address 0x4 - core index']
  #allocation1 [shape = 'u32[144,128]{1,0:T(1,128)}', space=vmem, size = 0x12000, scoped, tag = 'internal scratch']
  %s0 = inlined_call_operand.vmem [shape: bf16[1024,256], index: 0, kind: input, shape index: {}]
  %s1 = inlined_call_operand.vmem [shape: bf16[256,128], index: 1, kind: input, shape index: {}]
  %s2 = inlined_call_operand.vmem [shape: f32[1,128], index: 2, kind: input, shape index: {}]
  %s3 = inlined_call_operand.vmem [shape: bf16[128,128], index: 3, kind: input, shape index: {}]
  %s4 = inlined_call_operand.vmem [shape: f32[1,128], index: 4, kind: input, shape index: {}]
  %s5 = inlined_call_operand.vmem [shape: bf16[128,128], index: 5, kind: input, shape index: {}]
  %s6 = inlined_call_operand.vmem [shape: f32[1,128], index: 6, kind: input, shape index: {}]
  %s7 = inlined_call_operand.vmem [shape: f32[1024,128], index: 7, kind: output, shape index: {}]
  %s8 = sld [smem:[#allocation0]]
  $region61: #{neural_network_forward.1} parent=0
    _
  %s10 = ssub.s32 1, %s8
  %s11 = scalar_select 0, %s10, %s8
  loop: start=0, step=1, limit=4
  $region2: #{neural_network_forward.1} parent=0 // loop_pre_header
    _
  $region3: #{neural_network_forward.1} parent=0 // loop_header
    %s13 = sphi 0, %s17
    %p14 = scmp.ge.s32.totalorder %s13, 4
    %s23 = sphi 0, %s25
    %s26 = sphi 0, %s23
    %s27 = sphi 0, %s26
    %s43 = sphi 0, %s27
    %s47 = sphi 0, %s47
    %s49 = sphi 0, %s47
    %s50 = sphi 0, %s49
    %s64 = sphi 0, %s50
    %s68 = sphi 0, %s68
    %s70 = sphi 0, %s68
    %s71 = sphi 0, %s70
    %s85 = sphi 0, %s71
    %s89 = sphi 0, %s89
    %s91 = sphi 0, %s89
    %s92 = sphi 0, %s91
    %s106 = sphi 0, %s92
    %s110 = sphi 0, %s110
    %s112 = sphi 0, %s110
    %s113 = sphi 0, %s112
    %s127 = sphi 0, %s113
    %s131 = sphi 0, %s131
    %s133 = sphi 0, %s131
    %s134 = sphi 0, %s133
    %s148 = sphi 0, %s134
    %s152 = sphi 0, %s152
    %s154 = sphi 0, %s152
    %s155 = sphi 0, %s154
    %s169 = sphi 0, %s155
    %s175 = sphi 0, %s177
    %s178 = sphi 0, %s175
    %s179 = sphi 0, %s178
    %s195 = sphi 0, %s179
  $region4: #{neural_network_forward.1} parent=0 // loop_header_branch
    %16 = sbr.rel (%p14) target = $region8
  $region5: #{neural_network_forward.1} parent=0 // loop_body
    %s18 = ssub.s32 %s13, 1
    %s19 = ssub.s32 %s13, 2
    %s20 = sadd.s32 %s13, 1
    %s21 = ssub.s32 %s13, %s20
    %p22 = scmp.eq.s32.totalorder %s21, 0
    %s24 = sadd.s32 %s23, 1
    %s25 = scalar_select %p22, %s23, %s24
    %p28 = pneg %p22
    %p29 = scmp.eq.s32.totalorder %s13, 1
    %p30 = por %p28, %p29
    %p31 = scmp.ne.s32.totalorder %s23, %s26
    %p32 = scmp.eq.s32.totalorder %s13, 0
    %p33 = por %p31, %p32
    %p34 = scmp.ne.s32.totalorder %s23, %s26
    %p35 = scmp.eq.s32.totalorder %s18, 1
    %p36 = por %p34, %p35
    %p37 = scmp.ne.s32.totalorder %s26, %s27
    %p38 = scmp.eq.s32.totalorder %s18, 0
    %p39 = por %p37, %p38
    %p40 = scmp.ne.s32.totalorder %s26, %s27
    %p41 = scmp.eq.s32.totalorder %s19, 1
    %p42 = por %p40, %p41
    %p44 = scmp.ne.s32.totalorder %s27, %s43
    %p45 = scmp.eq.s32.totalorder %s19, 0
    %p46 = por %p44, %p45
    %s48 = sadd.s32 %s47, 1
    %p51 = scmp.eq.s32.totalorder %s13, 1
    %p52 = scmp.ne.s32.totalorder %s47, %s49
    %p53 = scmp.eq.s32.totalorder %s13, 0
    %p54 = por %p52, %p53
    %p55 = scmp.ne.s32.totalorder %s47, %s49
    %p56 = scmp.eq.s32.totalorder %s18, 1
    %p57 = por %p55, %p56
    %p58 = scmp.ne.s32.totalorder %s49, %s50
    %p59 = scmp.eq.s32.totalorder %s18, 0
    %p60 = por %p58, %p59
    %p61 = scmp.ne.s32.totalorder %s49, %s50
    %p62 = scmp.eq.s32.totalorder %s19, 1
    %p63 = por %p61, %p62
    %p65 = scmp.ne.s32.totalorder %s50, %s64
    %p66 = scmp.eq.s32.totalorder %s19, 0
    %p67 = por %p65, %p66
    %s69 = sadd.s32 %s68, 1
    %p72 = scmp.eq.s32.totalorder %s13, 1
    %p73 = scmp.ne.s32.totalorder %s68, %s70
    %p74 = scmp.eq.s32.totalorder %s13, 0
    %p75 = por %p73, %p74
    %p76 = scmp.ne.s32.totalorder %s68, %s70
    %p77 = scmp.eq.s32.totalorder %s18, 1
    %p78 = por %p76, %p77
    %p79 = scmp.ne.s32.totalorder %s70, %s71
    %p80 = scmp.eq.s32.totalorder %s18, 0
    %p81 = por %p79, %p80
    %p82 = scmp.ne.s32.totalorder %s70, %s71
    %p83 = scmp.eq.s32.totalorder %s19, 1
    %p84 = por %p82, %p83
    %p86 = scmp.ne.s32.totalorder %s71, %s85
    %p87 = scmp.eq.s32.totalorder %s19, 0
    %p88 = por %p86, %p87
    %s90 = sadd.s32 %s89, 1
    %p93 = scmp.eq.s32.totalorder %s13, 1
    %p94 = scmp.ne.s32.totalorder %s89, %s91
    %p95 = scmp.eq.s32.totalorder %s13, 0
    %p96 = por %p94, %p95
    %p97 = scmp.ne.s32.totalorder %s89, %s91
    %p98 = scmp.eq.s32.totalorder %s18, 1
    %p99 = por %p97, %p98
    %p100 = scmp.ne.s32.totalorder %s91, %s92
    %p101 = scmp.eq.s32.totalorder %s18, 0
    %p102 = por %p100, %p101
    %p103 = scmp.ne.s32.totalorder %s91, %s92
    %p104 = scmp.eq.s32.totalorder %s19, 1
    %p105 = por %p103, %p104
    %p107 = scmp.ne.s32.totalorder %s92, %s106
    %p108 = scmp.eq.s32.totalorder %s19, 0
    %p109 = por %p107, %p108
    %s111 = sadd.s32 %s110, 1
    %p114 = scmp.eq.s32.totalorder %s13, 1
    %p115 = scmp.ne.s32.totalorder %s110, %s112
    %p116 = scmp.eq.s32.totalorder %s13, 0
    %p117 = por %p115, %p116
    %p118 = scmp.ne.s32.totalorder %s110, %s112
    %p119 = scmp.eq.s32.totalorder %s18, 1
    %p120 = por %p118, %p119
    %p121 = scmp.ne.s32.totalorder %s112, %s113
    %p122 = scmp.eq.s32.totalorder %s18, 0
    %p123 = por %p121, %p122
    %p124 = scmp.ne.s32.totalorder %s112, %s113
    %p125 = scmp.eq.s32.totalorder %s19, 1
    %p126 = por %p124, %p125
    %p128 = scmp.ne.s32.totalorder %s113, %s127
    %p129 = scmp.eq.s32.totalorder %s19, 0
    %p130 = por %p128, %p129
    %s132 = sadd.s32 %s131, 1
    %p135 = scmp.eq.s32.totalorder %s13, 1
    %p136 = scmp.ne.s32.totalorder %s131, %s133
    %p137 = scmp.eq.s32.totalorder %s13, 0
    %p138 = por %p136, %p137
    %p139 = scmp.ne.s32.totalorder %s131, %s133
    %p140 = scmp.eq.s32.totalorder %s18, 1
    %p141 = por %p139, %p140
    %p142 = scmp.ne.s32.totalorder %s133, %s134
    %p143 = scmp.eq.s32.totalorder %s18, 0
    %p144 = por %p142, %p143
    %p145 = scmp.ne.s32.totalorder %s133, %s134
    %p146 = scmp.eq.s32.totalorder %s19, 1
    %p147 = por %p145, %p146
    %p149 = scmp.ne.s32.totalorder %s134, %s148
    %p150 = scmp.eq.s32.totalorder %s19, 0
    %p151 = por %p149, %p150
    %s153 = sadd.s32 %s152, 1
    %p156 = scmp.eq.s32.totalorder %s13, 1
    %p157 = scmp.ne.s32.totalorder %s152, %s154
    %p158 = scmp.eq.s32.totalorder %s13, 0
    %p159 = por %p157, %p158
    %p160 = scmp.ne.s32.totalorder %s152, %s154
    %p161 = scmp.eq.s32.totalorder %s18, 1
    %p162 = por %p160, %p161
    %p163 = scmp.ne.s32.totalorder %s154, %s155
    %p164 = scmp.eq.s32.totalorder %s18, 0
    %p165 = por %p163, %p164
    %p166 = scmp.ne.s32.totalorder %s154, %s155
    %p167 = scmp.eq.s32.totalorder %s19, 1
    %p168 = por %p166, %p167
    %p170 = scmp.ne.s32.totalorder %s155, %s169
    %p171 = scmp.eq.s32.totalorder %s19, 0
    %p172 = por %p170, %p171
    %s173 = ssub.s32 %s13, %s20
    %p174 = scmp.eq.s32.totalorder %s173, 0
    %s176 = sadd.s32 %s175, 1
    %s177 = scalar_select %p174, %s175, %s176
    %p180 = pneg %p174
    %p181 = scmp.eq.s32.totalorder %s13, 1
    %p182 = por %p180, %p181
    %p183 = scmp.ne.s32.totalorder %s175, %s178
    %p184 = scmp.eq.s32.totalorder %s13, 0
    %p185 = por %p183, %p184
    %p186 = scmp.ne.s32.totalorder %s175, %s178
    %p187 = scmp.eq.s32.totalorder %s18, 1
    %p188 = por %p186, %p187
    %p189 = scmp.ne.s32.totalorder %s178, %s179
    %p190 = scmp.eq.s32.totalorder %s18, 0
    %p191 = por %p189, %p190
    %p192 = scmp.ne.s32.totalorder %s178, %s179
    %p193 = scmp.eq.s32.totalorder %s19, 1
    %p194 = por %p192, %p193
    %p196 = scmp.ne.s32.totalorder %s179, %s195
    %p197 = scmp.eq.s32.totalorder %s19, 0
    %p198 = por %p196, %p197
    %p199 = scmp.le.s32.totalorder 1, %s13
    %p200 = scmp.lt.s32.totalorder %s13, 3
    %p201 = pnand %p199, %p200
    %p202 = pneg %p201
    // Predicated region
    $region9: #{neural_network_forward.1} parent=5 // pred_check
      _
    $region10: #{neural_network_forward.1} parent=5 // pred_check_branch
      %204 = sbr.rel (%p201) target = $region12
    $region11: #{neural_network_forward.1} parent=5 // pred_region
      %s205 = ssub.s32 %s13, 1
      // Predicated region
      $region13: #{neural_network_forward.1} parent=11 // pred_check
        %p206 = pneg %p60
      $region14: #{neural_network_forward.1} parent=11 // pred_check_branch
        %208 = sbr.rel (%p206) target = $region16
      $region15: #{neural_network_forward.1} parent=11 // pred_region
        _
      $region16: #{neural_network_forward.1} parent=11 // pred_fallthru
        _
      // Predicated region
      $region17: #{neural_network_forward.1} parent=11 // pred_check
        %p209 = pneg %p81
      $region18: #{neural_network_forward.1} parent=11 // pred_check_branch
        %211 = sbr.rel (%p209) target = $region20
      $region19: #{neural_network_forward.1} parent=11 // pred_region
        _
      $region20: #{neural_network_forward.1} parent=11 // pred_fallthru
        _
      // Predicated region
      $region21: #{neural_network_forward.1} parent=11 // pred_check
        %p212 = pneg %p102
      $region22: #{neural_network_forward.1} parent=11 // pred_check_branch
        %214 = sbr.rel (%p212) target = $region24
      $region23: #{neural_network_forward.1} parent=11 // pred_region
        _
      $region24: #{neural_network_forward.1} parent=11 // pred_fallthru
        _
      // Predicated region
      $region25: #{neural_network_forward.1} parent=11 // pred_check
        %p215 = pneg %p123
      $region26: #{neural_network_forward.1} parent=11 // pred_check_branch
        %217 = sbr.rel (%p215) target = $region28
      $region27: #{neural_network_forward.1} parent=11 // pred_region
        _
      $region28: #{neural_network_forward.1} parent=11 // pred_fallthru
        _
      // Predicated region
      $region29: #{neural_network_forward.1} parent=11 // pred_check
        %p218 = pneg %p144
      $region30: #{neural_network_forward.1} parent=11 // pred_check_branch
        %220 = sbr.rel (%p218) target = $region32
      $region31: #{neural_network_forward.1} parent=11 // pred_region
        _
      $region32: #{neural_network_forward.1} parent=11 // pred_fallthru
        _
      // Predicated region
      $region33: #{neural_network_forward.1} parent=11 // pred_check
        %p221 = pneg %p165
      $region34: #{neural_network_forward.1} parent=11 // pred_check_branch
        %223 = sbr.rel (%p221) target = $region36
      $region35: #{neural_network_forward.1} parent=11 // pred_region
        _
      $region36: #{neural_network_forward.1} parent=11 // pred_fallthru
        _
    $region12: #{neural_network_forward.1} parent=5 // pred_fallthru
      _
    %p224 = scmp.lt.s32.totalorder %s13, 2
    // Predicated region
    $region37: #{neural_network_forward.1} parent=5 // pred_check
      %p225 = pneg %p224
    $region38: #{neural_network_forward.1} parent=5 // pred_check_branch
      %227 = sbr.rel (%p225) target = $region40
    $region39: #{neural_network_forward.1} parent=5 // pred_region
      // Predicated region
      $region41: #{neural_network_forward.1} parent=39 // pred_check
        %p228 = pneg %p33
      $region42: #{neural_network_forward.1} parent=39 // pred_check_branch
        %230 = sbr.rel (%p228) target = $region44
      $region43: #{neural_network_forward.1} parent=39 // pred_region
        %s231 = smul.u32 64, %s13
        %p232 = scmp.lt.s32.totalorder %s231, 127
        %s233 = scalar_select %p232, %s231, 127
        %s234 = smul.addr %s233, 2
        %s235 = smul.addr %s234, 4
        %s236 = scalar_lea.vmem %s0, %s235
        %s237 = smul.u32 64, %s13
      $region44: #{neural_network_forward.1} parent=39 // pred_fallthru
        _
    $region40: #{neural_network_forward.1} parent=5 // pred_fallthru
      _
    %p238 = scmp.le.s32.totalorder 1, %s13
    %p239 = scmp.lt.s32.totalorder %s13, 3
    %p240 = pnand %p238, %p239
    %p241 = pneg %p240
    // Predicated region
    $region45: #{neural_network_forward.1} parent=5 // pred_check
      _
    $region46: #{neural_network_forward.1} parent=5 // pred_check_branch
      %243 = sbr.rel (%p240) target = $region48
    $region47: #{neural_network_forward.1} parent=5 // pred_region
      %s244 = ssub.s32 %s13, 1
      %s245 = smul.u32 64, %s18
      %p246 = scmp.lt.s32.totalorder %s245, 127
      %s247 = scalar_select %p246, %s245, 127
      %s248 = smul.addr %s247, 2
      %s249 = smul.addr %s248, 4
      %s250 = scalar_lea.vmem %s0, %s249
      %p251 = pneg %p39
      %p252 = pneg %p36
      %p253 = pneg %p60
      %p254 = pneg %p57
      %p255 = pneg %p81
      %p256 = pneg %p78
      %p257 = pneg %p102
      %p258 = pneg %p99
      %p259 = pneg %p123
      %p260 = pneg %p120
      %p261 = pneg %p144
      %p262 = pneg %p141
      %p263 = pneg %p165
      %p264 = pneg %p162
      %p265 = pneg %p191
      %p266 = pneg %p188
      %s267 = smul.u32 64, %s18
      %p268 = scmp.lt.s32.totalorder %s267, 127
      %s269 = scalar_select %p268, %s267, 127
      %s270 = smul.addr %s269, 8
      %s271 = scalar_lea.vmem %s7, %s270
      %s272 = smul.u32 64, %s18
      %p273 = scmp.lt.s32.totalorder %s272, 127
      %s274 = scalar_select %p273, %s272, 127
      %s275 = smul.addr %s274, 2
      %s276 = smul.addr %s275, 4
      %s277 = scalar_lea.vmem %s0, %s276
      %s278 = smul.u32 64, %s18
      %s279 = smul.u32 64, %s18
      %p280 = scmp.lt.s32.totalorder %s279, 127
      %s281 = scalar_select %p280, %s279, 127
      %s282 = smul.addr %s281, 8
      %s283 = scalar_lea.vmem %s7, %s282
      %s284 = smul.u32 64, %s18
      %v286 = vld [vmem:[%s277] sm:$0xff]
      %v287 = vld [vmem:[%s277 + $0x8] sm:$0xff]
      %v288 = vld [vmem:[%s277 + $0x10] sm:$0xff]
      %v289 = vld [vmem:[%s277 + $0x18] sm:$0xff]
      %v290 = vld [vmem:[%s277 + $0x20] sm:$0xff]
      %v291 = vld [vmem:[%s277 + $0x28] sm:$0xff]
      %v292 = vld [vmem:[%s277 + $0x30] sm:$0xff]
      %v293 = vld [vmem:[%s277 + $0x38] sm:$0xff]
      %v294 = vld [vmem:[%s277 + $0x40] sm:$0xff]
      %v295 = vld [vmem:[%s277 + $0x48] sm:$0xff]
      %v296 = vld [vmem:[%s277 + $0x50] sm:$0xff]
      %v297 = vld [vmem:[%s277 + $0x58] sm:$0xff]
      %v298 = vld [vmem:[%s277 + $0x60] sm:$0xff]
      %v299 = vld [vmem:[%s277 + $0x68] sm:$0xff]
      %v300 = vld [vmem:[%s277 + $0x70] sm:$0xff]
      %v301 = vld [vmem:[%s277 + $0x78] sm:$0xff]
      %v302 = vld [vmem:[%s277 + $0x80] sm:$0xff]
      %v303 = vld [vmem:[%s277 + $0x88] sm:$0xff]
      %v304 = vld [vmem:[%s277 + $0x90] sm:$0xff]
      %v305 = vld [vmem:[%s277 + $0x98] sm:$0xff]
      %v306 = vld [vmem:[%s277 + $0xa0] sm:$0xff]
      %v307 = vld [vmem:[%s277 + $0xa8] sm:$0xff]
      %v308 = vld [vmem:[%s277 + $0xb0] sm:$0xff]
      %v309 = vld [vmem:[%s277 + $0xb8] sm:$0xff]
      %v310 = vld [vmem:[%s277 + $0xc0] sm:$0xff]
      %v311 = vld [vmem:[%s277 + $0xc8] sm:$0xff]
      %v312 = vld [vmem:[%s277 + $0xd0] sm:$0xff]
      %v313 = vld [vmem:[%s277 + $0xd8] sm:$0xff]
      %v314 = vld [vmem:[%s277 + $0xe0] sm:$0xff]
      %v315 = vld [vmem:[%s277 + $0xe8] sm:$0xff]
      %v316 = vld [vmem:[%s277 + $0xf0] sm:$0xff]
      %v317 = vld [vmem:[%s277 + $0xf8] sm:$0xff]
      %v318 = vld [vmem:[%s277 + $0x100] sm:$0xff]
      %v319 = vld [vmem:[%s277 + $0x108] sm:$0xff]
      %v320 = vld [vmem:[%s277 + $0x110] sm:$0xff]
      %v321 = vld [vmem:[%s277 + $0x118] sm:$0xff]
      %v322 = vld [vmem:[%s277 + $0x120] sm:$0xff]
      %v323 = vld [vmem:[%s277 + $0x128] sm:$0xff]
      %v324 = vld [vmem:[%s277 + $0x130] sm:$0xff]
      %v325 = vld [vmem:[%s277 + $0x138] sm:$0xff]
      %v326 = vld [vmem:[%s277 + $0x140] sm:$0xff]
      %v327 = vld [vmem:[%s277 + $0x148] sm:$0xff]
      %v328 = vld [vmem:[%s277 + $0x150] sm:$0xff]
      %v329 = vld [vmem:[%s277 + $0x158] sm:$0xff]
      %v330 = vld [vmem:[%s277 + $0x160] sm:$0xff]
      %v331 = vld [vmem:[%s277 + $0x168] sm:$0xff]
      %v332 = vld [vmem:[%s277 + $0x170] sm:$0xff]
      %v333 = vld [vmem:[%s277 + $0x178] sm:$0xff]
      %v334 = vld [vmem:[%s277 + $0x180] sm:$0xff]
      %v335 = vld [vmem:[%s277 + $0x188] sm:$0xff]
      %v336 = vld [vmem:[%s277 + $0x190] sm:$0xff]
      %v337 = vld [vmem:[%s277 + $0x198] sm:$0xff]
      %v338 = vld [vmem:[%s277 + $0x1a0] sm:$0xff]
      %v339 = vld [vmem:[%s277 + $0x1a8] sm:$0xff]
      %v340 = vld [vmem:[%s277 + $0x1b0] sm:$0xff]
      %v341 = vld [vmem:[%s277 + $0x1b8] sm:$0xff]
      %v342 = vld [vmem:[%s277 + $0x1c0] sm:$0xff]
      %v343 = vld [vmem:[%s277 + $0x1c8] sm:$0xff]
      %v344 = vld [vmem:[%s277 + $0x1d0] sm:$0xff]
      %v345 = vld [vmem:[%s277 + $0x1d8] sm:$0xff]
      %v346 = vld [vmem:[%s277 + $0x1e0] sm:$0xff]
      %v347 = vld [vmem:[%s277 + $0x1e8] sm:$0xff]
      %v348 = vld [vmem:[%s277 + $0x1f0] sm:$0xff]
      %v349 = vld [vmem:[%s277 + $0x1f8] sm:$0xff]
      %v350 = vld [vmem:[%s1] sm:$0xf]
      %v351 = vld [vmem:[%s1 + $0x4] sm:$0xf]
      %v352 = vld [vmem:[%s1 + $0x8] sm:$0xf]
      %v353 = vld [vmem:[%s1 + $0xc] sm:$0xf]
      %v354 = vld [vmem:[%s1 + $0x10] sm:$0xf]
      %v355 = vld [vmem:[%s1 + $0x14] sm:$0xf]
      %v356 = vld [vmem:[%s1 + $0x18] sm:$0xf]
      %v357 = vld [vmem:[%s1 + $0x1c] sm:$0xf]
      %v358 = vld [vmem:[%s1 + $0x20] sm:$0xf]
      %v359 = vld [vmem:[%s1 + $0x24] sm:$0xf]
      %v360 = vld [vmem:[%s1 + $0x28] sm:$0xf]
      %v361 = vld [vmem:[%s1 + $0x2c] sm:$0xf]
      %v362 = vld [vmem:[%s1 + $0x30] sm:$0xf]
      %v363 = vld [vmem:[%s1 + $0x34] sm:$0xf]
      %v364 = vld [vmem:[%s1 + $0x38] sm:$0xf]
      %v365 = vld [vmem:[%s1 + $0x3c] sm:$0xf]
      %v366 = vld [vmem:[%s1 + $0x40] sm:$0xf]
      %v367 = vld [vmem:[%s1 + $0x44] sm:$0xf]
      %v368 = vld [vmem:[%s1 + $0x48] sm:$0xf]
      %v369 = vld [vmem:[%s1 + $0x4c] sm:$0xf]
      %v370 = vld [vmem:[%s1 + $0x50] sm:$0xf]
      %v371 = vld [vmem:[%s1 + $0x54] sm:$0xf]
      %v372 = vld [vmem:[%s1 + $0x58] sm:$0xf]
      %v373 = vld [vmem:[%s1 + $0x5c] sm:$0xf]
      %v374 = vld [vmem:[%s1 + $0x60] sm:$0xf]
      %v375 = vld [vmem:[%s1 + $0x64] sm:$0xf]
      %v376 = vld [vmem:[%s1 + $0x68] sm:$0xf]
      %v377 = vld [vmem:[%s1 + $0x6c] sm:$0xf]
      %v378 = vld [vmem:[%s1 + $0x70] sm:$0xf]
      %v379 = vld [vmem:[%s1 + $0x74] sm:$0xf]
      %v380 = vld [vmem:[%s1 + $0x78] sm:$0xf]
      %v381 = vld [vmem:[%s1 + $0x7c] sm:$0xf]
      %v382 = vld [vmem:[%s2] sm:$0x1]
      %v384 = vlaneseq
      %v385 = vshrl.u32 %v384, 7
      %v386 = vsub.s32 0, %v385
      %v387 = vrot.slane %v382, %v386
      %v453 = vunpack.c.l.b16 %v286
      %v454 = vunpack.c.h.b16 %v286
      %v455 = vunpack.c.l.b16 %v287
      %v456 = vunpack.c.h.b16 %v287
      %v457 = vunpack.c.l.b16 %v288
      %v458 = vunpack.c.h.b16 %v288
      %v459 = vunpack.c.l.b16 %v289
      %v460 = vunpack.c.h.b16 %v289
      %v461 = vunpack.c.l.b16 %v290
      %v462 = vunpack.c.h.b16 %v290
      %v463 = vunpack.c.l.b16 %v291
      %v464 = vunpack.c.h.b16 %v291
      %v465 = vunpack.c.l.b16 %v292
      %v466 = vunpack.c.h.b16 %v292
      %v467 = vunpack.c.l.b16 %v293
      %v468 = vunpack.c.h.b16 %v293
      %v469 = vunpack.c.l.b16 %v294
      %v470 = vunpack.c.h.b16 %v294
      %v471 = vunpack.c.l.b16 %v295
      %v472 = vunpack.c.h.b16 %v295
      %v473 = vunpack.c.l.b16 %v296
      %v474 = vunpack.c.h.b16 %v296
      %v475 = vunpack.c.l.b16 %v297
      %v476 = vunpack.c.h.b16 %v297
      %v477 = vunpack.c.l.b16 %v298
      %v478 = vunpack.c.h.b16 %v298
      %v479 = vunpack.c.l.b16 %v299
      %v480 = vunpack.c.h.b16 %v299
      %v481 = vunpack.c.l.b16 %v300
      %v482 = vunpack.c.h.b16 %v300
      %v483 = vunpack.c.l.b16 %v301
      %v484 = vunpack.c.h.b16 %v301
      %v485 = vunpack.c.l.b16 %v302
      %v486 = vunpack.c.h.b16 %v302
      %v487 = vunpack.c.l.b16 %v303
      %v488 = vunpack.c.h.b16 %v303
      %v489 = vunpack.c.l.b16 %v304
      %v490 = vunpack.c.h.b16 %v304
      %v491 = vunpack.c.l.b16 %v305
      %v492 = vunpack.c.h.b16 %v305
      %v493 = vunpack.c.l.b16 %v306
      %v494 = vunpack.c.h.b16 %v306
      %v495 = vunpack.c.l.b16 %v307
      %v496 = vunpack.c.h.b16 %v307
      %v497 = vunpack.c.l.b16 %v308
      %v498 = vunpack.c.h.b16 %v308
      %v499 = vunpack.c.l.b16 %v309
      %v500 = vunpack.c.h.b16 %v309
      %v501 = vunpack.c.l.b16 %v310
      %v502 = vunpack.c.h.b16 %v310
      %v503 = vunpack.c.l.b16 %v311
      %v504 = vunpack.c.h.b16 %v311
      %v505 = vunpack.c.l.b16 %v312
      %v506 = vunpack.c.h.b16 %v312
      %v507 = vunpack.c.l.b16 %v313
      %v508 = vunpack.c.h.b16 %v313
      %v509 = vunpack.c.l.b16 %v314
      %v510 = vunpack.c.h.b16 %v314
      %v511 = vunpack.c.l.b16 %v315
      %v512 = vunpack.c.h.b16 %v315
      %v513 = vunpack.c.l.b16 %v316
      %v514 = vunpack.c.h.b16 %v316
      %v515 = vunpack.c.l.b16 %v317
      %v516 = vunpack.c.h.b16 %v317
      %v517 = vunpack.c.l.b16 %v318
      %v518 = vunpack.c.h.b16 %v318
      %v519 = vunpack.c.l.b16 %v319
      %v520 = vunpack.c.h.b16 %v319
      %v521 = vunpack.c.l.b16 %v320
      %v522 = vunpack.c.h.b16 %v320
      %v523 = vunpack.c.l.b16 %v321
      %v524 = vunpack.c.h.b16 %v321
      %v525 = vunpack.c.l.b16 %v322
      %v526 = vunpack.c.h.b16 %v322
      %v527 = vunpack.c.l.b16 %v323
      %v528 = vunpack.c.h.b16 %v323
      %v529 = vunpack.c.l.b16 %v324
      %v530 = vunpack.c.h.b16 %v324
      %v531 = vunpack.c.l.b16 %v325
      %v532 = vunpack.c.h.b16 %v325
      %v533 = vunpack.c.l.b16 %v326
      %v534 = vunpack.c.h.b16 %v326
      %v535 = vunpack.c.l.b16 %v327
      %v536 = vunpack.c.h.b16 %v327
      %v537 = vunpack.c.l.b16 %v328
      %v538 = vunpack.c.h.b16 %v328
      %v539 = vunpack.c.l.b16 %v329
      %v540 = vunpack.c.h.b16 %v329
      %v541 = vunpack.c.l.b16 %v330
      %v542 = vunpack.c.h.b16 %v330
      %v543 = vunpack.c.l.b16 %v331
      %v544 = vunpack.c.h.b16 %v331
      %v545 = vunpack.c.l.b16 %v332
      %v546 = vunpack.c.h.b16 %v332
      %v547 = vunpack.c.l.b16 %v333
      %v548 = vunpack.c.h.b16 %v333
      %v549 = vunpack.c.l.b16 %v334
      %v550 = vunpack.c.h.b16 %v334
      %v551 = vunpack.c.l.b16 %v335
      %v552 = vunpack.c.h.b16 %v335
      %v553 = vunpack.c.l.b16 %v336
      %v554 = vunpack.c.h.b16 %v336
      %v555 = vunpack.c.l.b16 %v337
      %v556 = vunpack.c.h.b16 %v337
      %v557 = vunpack.c.l.b16 %v338
      %v558 = vunpack.c.h.b16 %v338
      %v559 = vunpack.c.l.b16 %v339
      %v560 = vunpack.c.h.b16 %v339
      %v561 = vunpack.c.l.b16 %v340
      %v562 = vunpack.c.h.b16 %v340
      %v563 = vunpack.c.l.b16 %v341
      %v564 = vunpack.c.h.b16 %v341
      %v565 = vunpack.c.l.b16 %v342
      %v566 = vunpack.c.h.b16 %v342
      %v567 = vunpack.c.l.b16 %v343
      %v568 = vunpack.c.h.b16 %v343
      %v569 = vunpack.c.l.b16 %v344
      %v570 = vunpack.c.h.b16 %v344
      %v571 = vunpack.c.l.b16 %v345
      %v572 = vunpack.c.h.b16 %v345
      %v573 = vunpack.c.l.b16 %v346
      %v574 = vunpack.c.h.b16 %v346
      %v575 = vunpack.c.l.b16 %v347
      %v576 = vunpack.c.h.b16 %v347
      %v577 = vunpack.c.l.b16 %v348
      %v578 = vunpack.c.h.b16 %v348
      %v579 = vunpack.c.l.b16 %v349
      %v580 = vunpack.c.h.b16 %v349
      %v581 = vpack.c.b16 %v455, %v453
      %v582 = vpack.c.b16 %v456, %v454
      %v583 = vpack.c.b16 %v459, %v457
      %v584 = vpack.c.b16 %v460, %v458
      %v585 = vpack.c.b16 %v463, %v461
      %v586 = vpack.c.b16 %v464, %v462
      %v587 = vpack.c.b16 %v467, %v465
      %v588 = vpack.c.b16 %v468, %v466
      %v589 = vpack.c.b16 %v471, %v469
      %v590 = vpack.c.b16 %v472, %v470
      %v591 = vpack.c.b16 %v475, %v473
      %v592 = vpack.c.b16 %v476, %v474
      %v593 = vpack.c.b16 %v479, %v477
      %v594 = vpack.c.b16 %v480, %v478
      %v595 = vpack.c.b16 %v483, %v481
      %v596 = vpack.c.b16 %v484, %v482
      %v597 = vpack.c.b16 %v487, %v485
      %v598 = vpack.c.b16 %v488, %v486
      %v599 = vpack.c.b16 %v491, %v489
      %v600 = vpack.c.b16 %v492, %v490
      %v601 = vpack.c.b16 %v495, %v493
      %v602 = vpack.c.b16 %v496, %v494
      %v603 = vpack.c.b16 %v499, %v497
      %v604 = vpack.c.b16 %v500, %v498
      %v605 = vpack.c.b16 %v503, %v501
      %v606 = vpack.c.b16 %v504, %v502
      %v607 = vpack.c.b16 %v507, %v505
      %v608 = vpack.c.b16 %v508, %v506
      %v609 = vpack.c.b16 %v511, %v509
      %v610 = vpack.c.b16 %v512, %v510
      %v611 = vpack.c.b16 %v515, %v513
      %v612 = vpack.c.b16 %v516, %v514
      %v613 = vpack.c.b16 %v519, %v517
      %v614 = vpack.c.b16 %v520, %v518
      %v615 = vpack.c.b16 %v523, %v521
      %v616 = vpack.c.b16 %v524, %v522
      %v617 = vpack.c.b16 %v527, %v525
      %v618 = vpack.c.b16 %v528, %v526
      %v619 = vpack.c.b16 %v531, %v529
      %v620 = vpack.c.b16 %v532, %v530
      %v621 = vpack.c.b16 %v535, %v533
      %v622 = vpack.c.b16 %v536, %v534
      %v623 = vpack.c.b16 %v539, %v537
      %v624 = vpack.c.b16 %v540, %v538
      %v625 = vpack.c.b16 %v543, %v541
      %v626 = vpack.c.b16 %v544, %v542
      %v627 = vpack.c.b16 %v547, %v545
      %v628 = vpack.c.b16 %v548, %v546
      %v629 = vpack.c.b16 %v551, %v549
      %v630 = vpack.c.b16 %v552, %v550
      %v631 = vpack.c.b16 %v555, %v553
      %v632 = vpack.c.b16 %v556, %v554
      %v633 = vpack.c.b16 %v559, %v557
      %v634 = vpack.c.b16 %v560, %v558
      %v635 = vpack.c.b16 %v563, %v561
      %v636 = vpack.c.b16 %v564, %v562
      %v637 = vpack.c.b16 %v567, %v565
      %v638 = vpack.c.b16 %v568, %v566
      %v639 = vpack.c.b16 %v571, %v569
      %v640 = vpack.c.b16 %v572, %v570
      %v641 = vpack.c.b16 %v575, %v573
      %v642 = vpack.c.b16 %v576, %v574
      %v643 = vpack.c.b16 %v579, %v577
      %v644 = vpack.c.b16 %v580, %v578
      %v741 = vunpack.c.l.b16 %v350
      %v742 = vunpack.c.l.b16 %v351
      %v743 = vunpack.c.l.b16 %v352
      %v744 = vunpack.c.l.b16 %v353
      %v745 = vunpack.c.l.b16 %v354
      %v746 = vunpack.c.l.b16 %v355
      %v747 = vunpack.c.l.b16 %v356
      %v748 = vunpack.c.l.b16 %v357
      %v749 = vunpack.c.l.b16 %v358
      %v750 = vunpack.c.l.b16 %v359
      %v751 = vunpack.c.l.b16 %v360
      %v752 = vunpack.c.l.b16 %v361
      %v753 = vunpack.c.l.b16 %v362
      %v754 = vunpack.c.l.b16 %v363
      %v755 = vunpack.c.l.b16 %v364
      %v756 = vunpack.c.l.b16 %v365
      %v757 = vunpack.c.l.b16 %v366
      %v758 = vunpack.c.l.b16 %v367
      %v759 = vunpack.c.l.b16 %v368
      %v760 = vunpack.c.l.b16 %v369
      %v761 = vunpack.c.l.b16 %v370
      %v762 = vunpack.c.l.b16 %v371
      %v763 = vunpack.c.l.b16 %v372
      %v764 = vunpack.c.l.b16 %v373
      %v765 = vunpack.c.l.b16 %v374
      %v766 = vunpack.c.l.b16 %v375
      %v767 = vunpack.c.l.b16 %v376
      %v768 = vunpack.c.l.b16 %v377
      %v769 = vunpack.c.l.b16 %v378
      %v770 = vunpack.c.l.b16 %v379
      %v771 = vunpack.c.l.b16 %v380
      %v772 = vunpack.c.l.b16 %v381
      %v773 = vpack.c.b16 %v742, %v741
      %v774 = vpack.c.b16 %v744, %v743
      %v775 = vpack.c.b16 %v746, %v745
      %v776 = vpack.c.b16 %v748, %v747
      %v777 = vpack.c.b16 %v750, %v749
      %v778 = vpack.c.b16 %v752, %v751
      %v779 = vpack.c.b16 %v754, %v753
      %v780 = vpack.c.b16 %v756, %v755
      %v781 = vpack.c.b16 %v758, %v757
      %v782 = vpack.c.b16 %v760, %v759
      %v783 = vpack.c.b16 %v762, %v761
      %v784 = vpack.c.b16 %v764, %v763
      %v785 = vpack.c.b16 %v766, %v765
      %v786 = vpack.c.b16 %v768, %v767
      %v787 = vpack.c.b16 %v770, %v769
      %v788 = vpack.c.b16 %v772, %v771
      %805 = vmatprep.subr.bf16.mxu0 0
      %806 = vmatpush1.bf16.msra.mxu0 %v773
      %807 = vmatprep.subr.bf16.mxu0 0
      %808 = vmatpush1.bf16.msra.mxu0 %v774
      %809 = vmatprep.subr.bf16.mxu0 0
      %810 = vmatpush1.bf16.msra.mxu0 %v775
      %811 = vmatprep.subr.bf16.mxu0 0
      %812 = vmatpush1.bf16.msra.mxu0 %v776
      %813 = vmatprep.subr.bf16.mxu0 0
      %814 = vmatpush1.bf16.msra.mxu0 %v777
      %815 = vmatprep.subr.bf16.mxu0 0
      %816 = vmatpush1.bf16.msra.mxu0 %v778
      %817 = vmatprep.subr.bf16.mxu0 0
      %818 = vmatpush1.bf16.msra.mxu0 %v779
      %819 = vmatprep.subr.bf16.mxu0 0
      %820 = vmatpush1.bf16.msra.mxu0 %v780
      %821 = vmatprep.subr.bf16.mxu0 0
      %822 = vmatpush1.bf16.msra.mxu0 %v781
      %823 = vmatprep.subr.bf16.mxu0 0
      %824 = vmatpush1.bf16.msra.mxu0 %v782
      %825 = vmatprep.subr.bf16.mxu0 0
      %826 = vmatpush1.bf16.msra.mxu0 %v783
      %827 = vmatprep.subr.bf16.mxu0 0
      %828 = vmatpush1.bf16.msra.mxu0 %v784
      %829 = vmatprep.subr.bf16.mxu0 0
      %830 = vmatpush1.bf16.msra.mxu0 %v785
      %831 = vmatprep.subr.bf16.mxu0 0
      %832 = vmatpush1.bf16.msra.mxu0 %v786
      %833 = vmatprep.subr.bf16.mxu0 0
      %834 = vmatpush1.bf16.msra.mxu0 %v787
      %835 = vmatprep.subr.bf16.mxu0 0
      %836 = vmatpush1.bf16.msra.mxu0 %v788
      %837 = vmatprep.mubr.bf16.mxu0 %v582
      %838 = vmatmul.mubr.bf16.gmra.mrb[0].mxu0 %v581
      %v839 = vpop.f32.mrb[0].mxu0
      %v840 = vadd.f32 %v387, %v839
      %v841 = vpop.f32.mrb[0].mxu0
      %v842 = vpop.f32.mrb[0].mxu0
      %v843 = vadd.f32 %v387, %v842
      %v844 = vpop.f32.mrb[0].mxu0
      %845 = vmatprep.mubr.bf16.mxu0 %v584
      %846 = vmatmul.mubr.bf16.gmra.mrb[0].mxu0 %v583
      %v847 = vpop.f32.mrb[0].mxu0
      %v848 = vadd.f32 %v387, %v847
      %v849 = vpop.f32.mrb[0].mxu0
      %v850 = vpop.f32.mrb[0].mxu0
      %v851 = vadd.f32 %v387, %v850
      %v852 = vpop.f32.mrb[0].mxu0
      %853 = vmatprep.mubr.bf16.mxu0 %v586
      %854 = vmatmul.mubr.bf16.gmra.mrb[0].mxu0 %v585
      %v855 = vpop.f32.mrb[0].mxu0
      %v856 = vadd.f32 %v387, %v855
      %v857 = vpop.f32.mrb[0].mxu0
      %v858 = vpop.f32.mrb[0].mxu0
      %v859 = vadd.f32 %v387, %v858
      %v860 = vpop.f32.mrb[0].mxu0
      %861 = vmatprep.mubr.bf16.mxu0 %v588
      %862 = vmatmul.mubr.bf16.gmra.mrb[0].mxu0 %v587
      %v863 = vpop.f32.mrb[0].mxu0
      %v864 = vadd.f32 %v387, %v863
      %v865 = vpop.f32.mrb[0].mxu0
      %v866 = vpop.f32.mrb[0].mxu0
      %v867 = vadd.f32 %v387, %v866
      %v868 = vpop.f32.mrb[0].mxu0
      %869 = vmatprep.mubr.bf16.mxu0 %v590
      %870 = vmatmul.mubr.bf16.gmra.mrb[0].mxu0 %v589
      %v871 = vpop.f32.mrb[0].mxu0
      %v872 = vadd.f32 %v387, %v871
      %v873 = vpop.f32.mrb[0].mxu0
      %v874 = vpop.f32.mrb[0].mxu0
      %v875 = vadd.f32 %v387, %v874
      %v876 = vpop.f32.mrb[0].mxu0
      %877 = vmatprep.mubr.bf16.mxu0 %v592
      %878 = vmatmul.mubr.bf16.gmra.mrb[0].mxu0 %v591
      %v879 = vpop.f32.mrb[0].mxu0
      %v880 = vadd.f32 %v387, %v879
      %v881 = vpop.f32.mrb[0].mxu0
      %v882 = vpop.f32.mrb[0].mxu0
      %v883 = vadd.f32 %v387, %v882
      %v884 = vpop.f32.mrb[0].mxu0
      %885 = vmatprep.mubr.bf16.mxu0 %v594
      %886 = vmatmul.mubr.bf16.gmra.mrb[0].mxu0 %v593
      %v887 = vpop.f32.mrb[0].mxu0
      %v888 = vadd.f32 %v387, %v887
      %v889 = vpop.f32.mrb[0].mxu0
      %v890 = vpop.f32.mrb[0].mxu0
      %v891 = vadd.f32 %v387, %v890
      %v892 = vpop.f32.mrb[0].mxu0
      %893 = vmatprep.mubr.bf16.mxu0 %v596
      %894 = vmatmul.mubr.bf16.gmra.mrb[0].mxu0 %v595
      %v895 = vpop.f32.mrb[0].mxu0
      %v896 = vadd.f32 %v387, %v895
      %v897 = vpop.f32.mrb[0].mxu0
      %v898 = vpop.f32.mrb[0].mxu0
      %v899 = vadd.f32 %v387, %v898
      %v900 = vpop.f32.mrb[0].mxu0
      %901 = vmatprep.mubr.bf16.mxu0 %v598
      %902 = vmatmul.mubr.bf16.gmra.mrb[0].mxu0 %v597
      %v903 = vpop.f32.mrb[0].mxu0
      %v904 = vadd.f32 %v387, %v903
      %v905 = vpop.f32.mrb[0].mxu0
      %v906 = vpop.f32.mrb[0].mxu0
      %v907 = vadd.f32 %v387, %v906
      %v908 = vpop.f32.mrb[0].mxu0
      %909 = vmatprep.mubr.bf16.mxu0 %v600
      %910 = vmatmul.mubr.bf16.gmra.mrb[0].mxu0 %v599
      %v911 = vpop.f32.mrb[0].mxu0
      %v912 = vadd.f32 %v387, %v911
      %v913 = vpop.f32.mrb[0].mxu0
      %v914 = vpop.f32.mrb[0].mxu0
      %v915 = vadd.f32 %v387, %v914
      %v916 = vpop.f32.mrb[0].mxu0
      %917 = vmatprep.mubr.bf16.mxu0 %v602
      %918 = vmatmul.mubr.bf16.gmra.mrb[0].mxu0 %v601
      %v919 = vpop.f32.mrb[0].mxu0
      %v920 = vadd.f32 %v387, %v919
      %v921 = vpop.f32.mrb[0].mxu0
      %v922 = vpop.f32.mrb[0].mxu0
      %v923 = vadd.f32 %v387, %v922
      %v924 = vpop.f32.mrb[0].mxu0
      %925 = vmatprep.mubr.bf16.mxu0 %v604
      %926 = vmatmul.mubr.bf16.gmra.mrb[0].mxu0 %v603
      %v927 = vpop.f32.mrb[0].mxu0
      %v928 = vadd.f32 %v387, %v927
      %v929 = vpop.f32.mrb[0].mxu0
      %v930 = vpop.f32.mrb[0].mxu0
      %v931 = vadd.f32 %v387, %v930
      %v932 = vpop.f32.mrb[0].mxu0
      %933 = vmatprep.mubr.bf16.mxu0 %v606
      %934 = vmatmul.mubr.bf16.gmra.mrb[0].mxu0 %v605
      %v935 = vpop.f32.mrb[0].mxu0
      %v936 = vadd.f32 %v387, %v935
      %v937 = vpop.f32.mrb[0].mxu0
      %v938 = vpop.f32.mrb[0].mxu0
      %v939 = vadd.f32 %v387, %v938
      %v940 = vpop.f32.mrb[0].mxu0
      %941 = vmatprep.mubr.bf16.mxu0 %v608
      %942 = vmatmul.mubr.bf16.gmra.mrb[0].mxu0 %v607
      %v943 = vpop.f32.mrb[0].mxu0
      %v944 = vadd.f32 %v387, %v943
      %v945 = vpop.f32.mrb[0].mxu0
      %v946 = vpop.f32.mrb[0].mxu0
      %v947 = vadd.f32 %v387, %v946
      %v948 = vpop.f32.mrb[0].mxu0
      %949 = vmatprep.mubr.bf16.mxu0 %v610
      %950 = vmatmul.mubr.bf16.gmra.mrb[0].mxu0 %v609
      %v951 = vpop.f32.mrb[0].mxu0
      %v952 = vadd.f32 %v387, %v951
      %v953 = vpop.f32.mrb[0].mxu0
      %v954 = vpop.f32.mrb[0].mxu0
      %v955 = vadd.f32 %v387, %v954
      %v956 = vpop.f32.mrb[0].mxu0
      %957 = vmatprep.mubr.bf16.mxu0 %v612
      %958 = vmatmul.mubr.bf16.gmra.mrb[0].mxu0 %v611
      %v959 = vpop.f32.mrb[0].mxu0
      %v960 = vadd.f32 %v387, %v959
      %v961 = vpop.f32.mrb[0].mxu0
      %v962 = vpop.f32.mrb[0].mxu0
      %v963 = vadd.f32 %v387, %v962
      %v964 = vpop.f32.mrb[0].mxu0
      %965 = vmatprep.mubr.bf16.mxu0 %v614
      %966 = vmatmul.mubr.bf16.gmra.mrb[0].mxu0 %v613
      %v967 = vpop.f32.mrb[0].mxu0
      %v968 = vadd.f32 %v387, %v967
      %v969 = vpop.f32.mrb[0].mxu0
      %v970 = vpop.f32.mrb[0].mxu0
      %v971 = vadd.f32 %v387, %v970
      %v972 = vpop.f32.mrb[0].mxu0
      %973 = vmatprep.mubr.bf16.mxu0 %v616
      %974 = vmatmul.mubr.bf16.gmra.mrb[0].mxu0 %v615
      %v975 = vpop.f32.mrb[0].mxu0
      %v976 = vadd.f32 %v387, %v975
      %v977 = vpop.f32.mrb[0].mxu0
      %v978 = vpop.f32.mrb[0].mxu0
      %v979 = vadd.f32 %v387, %v978
      %v980 = vpop.f32.mrb[0].mxu0
      %981 = vmatprep.mubr.bf16.mxu0 %v618
      %982 = vmatmul.mubr.bf16.gmra.mrb[0].mxu0 %v617
      %v983 = vpop.f32.mrb[0].mxu0
      %v984 = vadd.f32 %v387, %v983
      %v985 = vpop.f32.mrb[0].mxu0
      %v986 = vpop.f32.mrb[0].mxu0
      %v987 = vadd.f32 %v387, %v986
      %v988 = vpop.f32.mrb[0].mxu0
      %989 = vmatprep.mubr.bf16.mxu0 %v620
      %990 = vmatmul.mubr.bf16.gmra.mrb[0].mxu0 %v619
      %v991 = vpop.f32.mrb[0].mxu0
      %v992 = vadd.f32 %v387, %v991
      %v993 = vpop.f32.mrb[0].mxu0
      %v994 = vpop.f32.mrb[0].mxu0
      %v995 = vadd.f32 %v387, %v994
      %v996 = vpop.f32.mrb[0].mxu0
      %997 = vmatprep.mubr.bf16.mxu0 %v622
      %998 = vmatmul.mubr.bf16.gmra.mrb[0].mxu0 %v621
      %v999 = vpop.f32.mrb[0].mxu0
      %v1000 = vadd.f32 %v387, %v999
      %v1001 = vpop.f32.mrb[0].mxu0
      %v1002 = vpop.f32.mrb[0].mxu0
      %v1003 = vadd.f32 %v387, %v1002
      %v1004 = vpop.f32.mrb[0].mxu0
      %1005 = vmatprep.mubr.bf16.mxu0 %v624
      %1006 = vmatmul.mubr.bf16.gmra.mrb[0].mxu0 %v623
      %v1007 = vpop.f32.mrb[0].mxu0
      %v1008 = vadd.f32 %v387, %v1007
      %v1009 = vpop.f32.mrb[0].mxu0
      %v1010 = vpop.f32.mrb[0].mxu0
      %v1011 = vadd.f32 %v387, %v1010
      %v1012 = vpop.f32.mrb[0].mxu0
      %1013 = vmatprep.mubr.bf16.mxu0 %v626
      %1014 = vmatmul.mubr.bf16.gmra.mrb[0].mxu0 %v625
      %v1015 = vpop.f32.mrb[0].mxu0
      %v1016 = vadd.f32 %v387, %v1015
      %v1017 = vpop.f32.mrb[0].mxu0
      %v1018 = vpop.f32.mrb[0].mxu0
      %v1019 = vadd.f32 %v387, %v1018
      %v1020 = vpop.f32.mrb[0].mxu0
      %1021 = vmatprep.mubr.bf16.mxu0 %v628
      %1022 = vmatmul.mubr.bf16.gmra.mrb[0].mxu0 %v627
      %v1023 = vpop.f32.mrb[0].mxu0
      %v1024 = vadd.f32 %v387, %v1023
      %v1025 = vpop.f32.mrb[0].mxu0
      %v1026 = vpop.f32.mrb[0].mxu0
      %v1027 = vadd.f32 %v387, %v1026
      %v1028 = vpop.f32.mrb[0].mxu0
      %1029 = vmatprep.mubr.bf16.mxu0 %v630
      %1030 = vmatmul.mubr.bf16.gmra.mrb[0].mxu0 %v629
      %v1031 = vpop.f32.mrb[0].mxu0
      %v1032 = vadd.f32 %v387, %v1031
      %v1033 = vpop.f32.mrb[0].mxu0
      %v1034 = vpop.f32.mrb[0].mxu0
      %v1035 = vadd.f32 %v387, %v1034
      %v1036 = vpop.f32.mrb[0].mxu0
      %1037 = vmatprep.mubr.bf16.mxu0 %v632
      %1038 = vmatmul.mubr.bf16.gmra.mrb[0].mxu0 %v631
      %v1039 = vpop.f32.mrb[0].mxu0
      %v1040 = vadd.f32 %v387, %v1039
      %v1041 = vpop.f32.mrb[0].mxu0
      %v1042 = vpop.f32.mrb[0].mxu0
      %v1043 = vadd.f32 %v387, %v1042
      %v1044 = vpop.f32.mrb[0].mxu0
      %1045 = vmatprep.mubr.bf16.mxu0 %v634
      %1046 = vmatmul.mubr.bf16.gmra.mrb[0].mxu0 %v633
      %v1047 = vpop.f32.mrb[0].mxu0
      %v1048 = vadd.f32 %v387, %v1047
      %v1049 = vpop.f32.mrb[0].mxu0
      %v1050 = vpop.f32.mrb[0].mxu0
      %v1051 = vadd.f32 %v387, %v1050
      %v1052 = vpop.f32.mrb[0].mxu0
      %1053 = vmatprep.mubr.bf16.mxu0 %v636
      %1054 = vmatmul.mubr.bf16.gmra.mrb[0].mxu0 %v635
      %v1055 = vpop.f32.mrb[0].mxu0
      %v1056 = vadd.f32 %v387, %v1055
      %v1057 = vpop.f32.mrb[0].mxu0
      %v1058 = vpop.f32.mrb[0].mxu0
      %v1059 = vadd.f32 %v387, %v1058
      %v1060 = vpop.f32.mrb[0].mxu0
      %1061 = vmatprep.mubr.bf16.mxu0 %v638
      %1062 = vmatmul.mubr.bf16.gmra.mrb[0].mxu0 %v637
      %v1063 = vpop.f32.mrb[0].mxu0
      %v1064 = vadd.f32 %v387, %v1063
      %v1065 = vpop.f32.mrb[0].mxu0
      %v1066 = vpop.f32.mrb[0].mxu0
      %v1067 = vadd.f32 %v387, %v1066
      %v1068 = vpop.f32.mrb[0].mxu0
      %1069 = vmatprep.mubr.bf16.mxu0 %v640
      %1070 = vmatmul.mubr.bf16.gmra.mrb[0].mxu0 %v639
      %v1071 = vpop.f32.mrb[0].mxu0
      %v1072 = vadd.f32 %v387, %v1071
      %v1073 = vpop.f32.mrb[0].mxu0
      %v1074 = vpop.f32.mrb[0].mxu0
      %v1075 = vadd.f32 %v387, %v1074
      %v1076 = vpop.f32.mrb[0].mxu0
      %1077 = vmatprep.mubr.bf16.mxu0 %v642
      %1078 = vmatmul.mubr.bf16.gmra.mrb[0].mxu0 %v641
      %v1079 = vpop.f32.mrb[0].mxu0
      %v1080 = vadd.f32 %v387, %v1079
      %v1081 = vpop.f32.mrb[0].mxu0
      %v1082 = vpop.f32.mrb[0].mxu0
      %v1083 = vadd.f32 %v387, %v1082
      %v1084 = vpop.f32.mrb[0].mxu0
      %1085 = vmatprep.mubr.bf16.mxu0 %v644
      %1086 = vmatmul.mubr.bf16.gmra.mrb[0].mxu0 %v643
      %v1087 = vpop.f32.mrb[0].mxu0
      %v1088 = vadd.f32 %v387, %v1087
      %v1089 = vpop.f32.mrb[0].mxu0
      %v1090 = vpop.f32.mrb[0].mxu0
      %v1091 = vadd.f32 %v387, %v1090
      %v1092 = vpop.f32.mrb[0].mxu0
      %1093 = vdwg.mxu0
      %v1094 = vtanh.pop %v840
      %v1095 = vtanh.pop %v843
      %v1096 = vtanh.pop %v848
      %v1097 = vtanh.pop %v851
      %v1098 = vtanh.pop %v856
      %v1099 = vtanh.pop %v859
      %v1100 = vtanh.pop %v864
      %v1101 = vtanh.pop %v867
      %v1102 = vtanh.pop %v872
      %v1103 = vtanh.pop %v875
      %v1104 = vtanh.pop %v880
      %v1105 = vtanh.pop %v883
      %v1106 = vtanh.pop %v888
      %v1107 = vtanh.pop %v891
      %v1108 = vtanh.pop %v896
      %v1109 = vtanh.pop %v899
      %v1110 = vtanh.pop %v904
      %v1111 = vtanh.pop %v907
      %v1112 = vtanh.pop %v912
      %v1113 = vtanh.pop %v915
      %v1114 = vtanh.pop %v920
      %v1115 = vtanh.pop %v923
      %v1116 = vtanh.pop %v928
      %v1117 = vtanh.pop %v931
      %v1118 = vtanh.pop %v936
      %v1119 = vtanh.pop %v939
      %v1120 = vtanh.pop %v944
      %v1121 = vtanh.pop %v947
      %v1122 = vtanh.pop %v952
      %v1123 = vtanh.pop %v955
      %v1124 = vtanh.pop %v960
      %v1125 = vtanh.pop %v963
      %v1126 = vtanh.pop %v968
      %v1127 = vtanh.pop %v971
      %v1128 = vtanh.pop %v976
      %v1129 = vtanh.pop %v979
      %v1130 = vtanh.pop %v984
      %v1131 = vtanh.pop %v987
      %v1132 = vtanh.pop %v992
      %v1133 = vtanh.pop %v995
      %v1134 = vtanh.pop %v1000
      %v1135 = vtanh.pop %v1003
      %v1136 = vtanh.pop %v1008
      %v1137 = vtanh.pop %v1011
      %v1138 = vtanh.pop %v1016
      %v1139 = vtanh.pop %v1019
      %v1140 = vtanh.pop %v1024
      %v1141 = vtanh.pop %v1027
      %v1142 = vtanh.pop %v1032
      %v1143 = vtanh.pop %v1035
      %v1144 = vtanh.pop %v1040
      %v1145 = vtanh.pop %v1043
      %v1146 = vtanh.pop %v1048
      %v1147 = vtanh.pop %v1051
      %v1148 = vtanh.pop %v1056
      %v1149 = vtanh.pop %v1059
      %v1150 = vtanh.pop %v1064
      %v1151 = vtanh.pop %v1067
      %v1152 = vtanh.pop %v1072
      %v1153 = vtanh.pop %v1075
      %v1154 = vtanh.pop %v1080
      %v1155 = vtanh.pop %v1083
      %v1156 = vtanh.pop %v1088
      %v1157 = vtanh.pop %v1091
      %v1158 = vpack.c.bf16 %v1095, %v1094
      %v1159 = vpack.c.bf16 %v1097, %v1096
      %v1160 = vpack.c.bf16 %v1099, %v1098
      %v1161 = vpack.c.bf16 %v1101, %v1100
      %v1162 = vpack.c.bf16 %v1103, %v1102
      %v1163 = vpack.c.bf16 %v1105, %v1104
      %v1164 = vpack.c.bf16 %v1107, %v1106
      %v1165 = vpack.c.bf16 %v1109, %v1108
      %v1166 = vpack.c.bf16 %v1111, %v1110
      %v1167 = vpack.c.bf16 %v1113, %v1112
      %v1168 = vpack.c.bf16 %v1115, %v1114
      %v1169 = vpack.c.bf16 %v1117, %v1116
      %v1170 = vpack.c.bf16 %v1119, %v1118
      %v1171 = vpack.c.bf16 %v1121, %v1120
      %v1172 = vpack.c.bf16 %v1123, %v1122
      %v1173 = vpack.c.bf16 %v1125, %v1124
      %v1174 = vpack.c.bf16 %v1127, %v1126
      %v1175 = vpack.c.bf16 %v1129, %v1128
      %v1176 = vpack.c.bf16 %v1131, %v1130
      %v1177 = vpack.c.bf16 %v1133, %v1132
      %v1178 = vpack.c.bf16 %v1135, %v1134
      %v1179 = vpack.c.bf16 %v1137, %v1136
      %v1180 = vpack.c.bf16 %v1139, %v1138
      %v1181 = vpack.c.bf16 %v1141, %v1140
      %v1182 = vpack.c.bf16 %v1143, %v1142
      %v1183 = vpack.c.bf16 %v1145, %v1144
      %v1184 = vpack.c.bf16 %v1147, %v1146
      %v1185 = vpack.c.bf16 %v1149, %v1148
      %v1186 = vpack.c.bf16 %v1151, %v1150
      %v1187 = vpack.c.bf16 %v1153, %v1152
      %v1188 = vpack.c.bf16 %v1155, %v1154
      %v1189 = vpack.c.bf16 %v1157, %v1156
      %v1190 = vld [vmem:[%s3] sm:$0xf]
      %v1191 = vld [vmem:[%s3 + $0x4] sm:$0xf]
      %v1192 = vld [vmem:[%s3 + $0x8] sm:$0xf]
      %v1193 = vld [vmem:[%s3 + $0xc] sm:$0xf]
      %v1194 = vld [vmem:[%s3 + $0x10] sm:$0xf]
      %v1195 = vld [vmem:[%s3 + $0x14] sm:$0xf]
      %v1196 = vld [vmem:[%s3 + $0x18] sm:$0xf]
      %v1197 = vld [vmem:[%s3 + $0x1c] sm:$0xf]
      %v1198 = vld [vmem:[%s3 + $0x20] sm:$0xf]
      %v1199 = vld [vmem:[%s3 + $0x24] sm:$0xf]
      %v1200 = vld [vmem:[%s3 + $0x28] sm:$0xf]
      %v1201 = vld [vmem:[%s3 + $0x2c] sm:$0xf]
      %v1202 = vld [vmem:[%s3 + $0x30] sm:$0xf]
      %v1203 = vld [vmem:[%s3 + $0x34] sm:$0xf]
      %v1204 = vld [vmem:[%s3 + $0x38] sm:$0xf]
      %v1205 = vld [vmem:[%s3 + $0x3c] sm:$0xf]
      %v1206 = vld [vmem:[%s4] sm:$0x1]
      %v1208 = vlaneseq
      %v1209 = vshrl.u32 %v1208, 7
      %v1210 = vsub.s32 0, %v1209
      %v1211 = vrot.slane %v1206, %v1210
      %v1229 = vunpack.c.l.b16 %v1190
      %v1230 = vunpack.c.l.b16 %v1191
      %v1231 = vunpack.c.l.b16 %v1192
      %v1232 = vunpack.c.l.b16 %v1193
      %v1233 = vunpack.c.l.b16 %v1194
      %v1234 = vunpack.c.l.b16 %v1195
      %v1235 = vunpack.c.l.b16 %v1196
      %v1236 = vunpack.c.l.b16 %v1197
      %v1237 = vunpack.c.l.b16 %v1198
      %v1238 = vunpack.c.l.b16 %v1199
      %v1239 = vunpack.c.l.b16 %v1200
      %v1240 = vunpack.c.l.b16 %v1201
      %v1241 = vunpack.c.l.b16 %v1202
      %v1242 = vunpack.c.l.b16 %v1203
      %v1243 = vunpack.c.l.b16 %v1204
      %v1244 = vunpack.c.l.b16 %v1205
      %v1245 = vpack.c.b16 %v1230, %v1229
      %v1246 = vpack.c.b16 %v1232, %v1231
      %v1247 = vpack.c.b16 %v1234, %v1233
      %v1248 = vpack.c.b16 %v1236, %v1235
      %v1249 = vpack.c.b16 %v1238, %v1237
      %v1250 = vpack.c.b16 %v1240, %v1239
      %v1251 = vpack.c.b16 %v1242, %v1241
      %v1252 = vpack.c.b16 %v1244, %v1243
      %1261 = vmatprep.subr.bf16.mxu0 0
      %1262 = vmatpush1.bf16.msra.mxu0 %v1245
      %1263 = vmatprep.subr.bf16.mxu0 0
      %1264 = vmatpush1.bf16.msra.mxu0 %v1246
      %1265 = vmatprep.subr.bf16.mxu0 0
      %1266 = vmatpush1.bf16.msra.mxu0 %v1247
      %1267 = vmatprep.subr.bf16.mxu0 0
      %1268 = vmatpush1.bf16.msra.mxu0 %v1248
      %1269 = vmatprep.subr.bf16.mxu0 0
      %1270 = vmatpush1.bf16.msra.mxu0 %v1249
      %1271 = vmatprep.subr.bf16.mxu0 0
      %1272 = vmatpush1.bf16.msra.mxu0 %v1250
      %1273 = vmatprep.subr.bf16.mxu0 0
      %1274 = vmatpush1.bf16.msra.mxu0 %v1251
      %1275 = vmatprep.subr.bf16.mxu0 0
      %1276 = vmatpush1.bf16.msra.mxu0 %v1252
      %1277 = vmatprep.subr.bf16.mxu0 0
      %1278 = vmatpush1.bf16.msra.mxu0 0
      %1279 = vmatprep.subr.bf16.mxu0 0
      %1280 = vmatpush1.bf16.msra.mxu0 0
      %1281 = vmatprep.subr.bf16.mxu0 0
      %1282 = vmatpush1.bf16.msra.mxu0 0
      %1283 = vmatprep.subr.bf16.mxu0 0
      %1284 = vmatpush1.bf16.msra.mxu0 0
      %1285 = vmatprep.subr.bf16.mxu0 0
      %1286 = vmatpush1.bf16.msra.mxu0 0
      %1287 = vmatprep.subr.bf16.mxu0 0
      %1288 = vmatpush1.bf16.msra.mxu0 0
      %1289 = vmatprep.subr.bf16.mxu0 0
      %1290 = vmatpush1.bf16.msra.mxu0 0
      %1291 = vmatprep.subr.bf16.mxu0 0
      %1292 = vmatpush1.bf16.msra.mxu0 0
      %1293 = vmatprep.mubr.bf16.mxu0 0
      %1294 = vmatmul.mubr.bf16.gmra.mrb[0].mxu0 %v1158
      %v1295 = vpop.f32.mrb[0].mxu0
      %v1296 = vadd.f32 %v1211, %v1295
      %v1297 = vpop.f32.mrb[0].mxu0
      %v1298 = vpop.f32.mrb[0].mxu0
      %v1299 = vadd.f32 %v1211, %v1298
      %v1300 = vpop.f32.mrb[0].mxu0
      %1301 = vmatprep.mubr.bf16.mxu0 0
      %1302 = vmatmul.mubr.bf16.gmra.mrb[0].mxu0 %v1159
      %v1303 = vpop.f32.mrb[0].mxu0
      %v1304 = vadd.f32 %v1211, %v1303
      %v1305 = vpop.f32.mrb[0].mxu0
      %v1306 = vpop.f32.mrb[0].mxu0
      %v1307 = vadd.f32 %v1211, %v1306
      %v1308 = vpop.f32.mrb[0].mxu0
      %1309 = vmatprep.mubr.bf16.mxu0 0
      %1310 = vmatmul.mubr.bf16.gmra.mrb[0].mxu0 %v1160
      %v1311 = vpop.f32.mrb[0].mxu0
      %v1312 = vadd.f32 %v1211, %v1311
      %v1313 = vpop.f32.mrb[0].mxu0
      %v1314 = vpop.f32.mrb[0].mxu0
      %v1315 = vadd.f32 %v1211, %v1314
      %v1316 = vpop.f32.mrb[0].mxu0
      %1317 = vmatprep.mubr.bf16.mxu0 0
      %1318 = vmatmul.mubr.bf16.gmra.mrb[0].mxu0 %v1161
      %v1319 = vpop.f32.mrb[0].mxu0
      %v1320 = vadd.f32 %v1211, %v1319
      %v1321 = vpop.f32.mrb[0].mxu0
      %v1322 = vpop.f32.mrb[0].mxu0
      %v1323 = vadd.f32 %v1211, %v1322
      %v1324 = vpop.f32.mrb[0].mxu0
      %1325 = vmatprep.mubr.bf16.mxu0 0
      %1326 = vmatmul.mubr.bf16.gmra.mrb[0].mxu0 %v1162
      %v1327 = vpop.f32.mrb[0].mxu0
      %v1328 = vadd.f32 %v1211, %v1327
      %v1329 = vpop.f32.mrb[0].mxu0
      %v1330 = vpop.f32.mrb[0].mxu0
      %v1331 = vadd.f32 %v1211, %v1330
      %v1332 = vpop.f32.mrb[0].mxu0
      %1333 = vmatprep.mubr.bf16.mxu0 0
      %1334 = vmatmul.mubr.bf16.gmra.mrb[0].mxu0 %v1163
      %v1335 = vpop.f32.mrb[0].mxu0
      %v1336 = vadd.f32 %v1211, %v1335
      %v1337 = vpop.f32.mrb[0].mxu0
      %v1338 = vpop.f32.mrb[0].mxu0
      %v1339 = vadd.f32 %v1211, %v1338
      %v1340 = vpop.f32.mrb[0].mxu0
      %1341 = vmatprep.mubr.bf16.mxu0 0
      %1342 = vmatmul.mubr.bf16.gmra.mrb[0].mxu0 %v1164
      %v1343 = vpop.f32.mrb[0].mxu0
      %v1344 = vadd.f32 %v1211, %v1343
      %v1345 = vpop.f32.mrb[0].mxu0
      %v1346 = vpop.f32.mrb[0].mxu0
      %v1347 = vadd.f32 %v1211, %v1346
      %v1348 = vpop.f32.mrb[0].mxu0
      %1349 = vmatprep.mubr.bf16.mxu0 0
      %1350 = vmatmul.mubr.bf16.gmra.mrb[0].mxu0 %v1165
      %v1351 = vpop.f32.mrb[0].mxu0
      %v1352 = vadd.f32 %v1211, %v1351
      %v1353 = vpop.f32.mrb[0].mxu0
      %v1354 = vpop.f32.mrb[0].mxu0
      %v1355 = vadd.f32 %v1211, %v1354
      %v1356 = vpop.f32.mrb[0].mxu0
      %1357 = vmatprep.mubr.bf16.mxu0 0
      %1358 = vmatmul.mubr.bf16.gmra.mrb[0].mxu0 %v1166
      %v1359 = vpop.f32.mrb[0].mxu0
      %v1360 = vadd.f32 %v1211, %v1359
      %v1361 = vpop.f32.mrb[0].mxu0
      %v1362 = vpop.f32.mrb[0].mxu0
      %v1363 = vadd.f32 %v1211, %v1362
      %v1364 = vpop.f32.mrb[0].mxu0
      %1365 = vmatprep.mubr.bf16.mxu0 0
      %1366 = vmatmul.mubr.bf16.gmra.mrb[0].mxu0 %v1167
      %v1367 = vpop.f32.mrb[0].mxu0
      %v1368 = vadd.f32 %v1211, %v1367
      %v1369 = vpop.f32.mrb[0].mxu0
      %v1370 = vpop.f32.mrb[0].mxu0
      %v1371 = vadd.f32 %v1211, %v1370
      %v1372 = vpop.f32.mrb[0].mxu0
      %1373 = vmatprep.mubr.bf16.mxu0 0
      %1374 = vmatmul.mubr.bf16.gmra.mrb[0].mxu0 %v1168
      %v1375 = vpop.f32.mrb[0].mxu0
      %v1376 = vadd.f32 %v1211, %v1375
      %v1377 = vpop.f32.mrb[0].mxu0
      %v1378 = vpop.f32.mrb[0].mxu0
      %v1379 = vadd.f32 %v1211, %v1378
      %v1380 = vpop.f32.mrb[0].mxu0
      %1381 = vmatprep.mubr.bf16.mxu0 0
      %1382 = vmatmul.mubr.bf16.gmra.mrb[0].mxu0 %v1169
      %v1383 = vpop.f32.mrb[0].mxu0
      %v1384 = vadd.f32 %v1211, %v1383
      %v1385 = vpop.f32.mrb[0].mxu0
      %v1386 = vpop.f32.mrb[0].mxu0
      %v1387 = vadd.f32 %v1211, %v1386
      %v1388 = vpop.f32.mrb[0].mxu0
      %1389 = vmatprep.mubr.bf16.mxu0 0
      %1390 = vmatmul.mubr.bf16.gmra.mrb[0].mxu0 %v1170
      %v1391 = vpop.f32.mrb[0].mxu0
      %v1392 = vadd.f32 %v1211, %v1391
      %v1393 = vpop.f32.mrb[0].mxu0
      %v1394 = vpop.f32.mrb[0].mxu0
      %v1395 = vadd.f32 %v1211, %v1394
      %v1396 = vpop.f32.mrb[0].mxu0
      %1397 = vmatprep.mubr.bf16.mxu0 0
      %1398 = vmatmul.mubr.bf16.gmra.mrb[0].mxu0 %v1171
      %v1399 = vpop.f32.mrb[0].mxu0
      %v1400 = vadd.f32 %v1211, %v1399
      %v1401 = vpop.f32.mrb[0].mxu0
      %v1402 = vpop.f32.mrb[0].mxu0
      %v1403 = vadd.f32 %v1211, %v1402
      %v1404 = vpop.f32.mrb[0].mxu0
      %1405 = vmatprep.mubr.bf16.mxu0 0
      %1406 = vmatmul.mubr.bf16.gmra.mrb[0].mxu0 %v1172
      %v1407 = vpop.f32.mrb[0].mxu0
      %v1408 = vadd.f32 %v1211, %v1407
      %v1409 = vpop.f32.mrb[0].mxu0
      %v1410 = vpop.f32.mrb[0].mxu0
      %v1411 = vadd.f32 %v1211, %v1410
      %v1412 = vpop.f32.mrb[0].mxu0
      %1413 = vmatprep.mubr.bf16.mxu0 0
      %1414 = vmatmul.mubr.bf16.gmra.mrb[0].mxu0 %v1173
      %v1415 = vpop.f32.mrb[0].mxu0
      %v1416 = vadd.f32 %v1211, %v1415
      %v1417 = vpop.f32.mrb[0].mxu0
      %v1418 = vpop.f32.mrb[0].mxu0
      %v1419 = vadd.f32 %v1211, %v1418
      %v1420 = vpop.f32.mrb[0].mxu0
      %1421 = vmatprep.mubr.bf16.mxu0 0
      %1422 = vmatmul.mubr.bf16.gmra.mrb[0].mxu0 %v1174
      %v1423 = vpop.f32.mrb[0].mxu0
      %v1424 = vadd.f32 %v1211, %v1423
      %v1425 = vpop.f32.mrb[0].mxu0
      %v1426 = vpop.f32.mrb[0].mxu0
      %v1427 = vadd.f32 %v1211, %v1426
      %v1428 = vpop.f32.mrb[0].mxu0
      %1429 = vmatprep.mubr.bf16.mxu0 0
      %1430 = vmatmul.mubr.bf16.gmra.mrb[0].mxu0 %v1175
      %v1431 = vpop.f32.mrb[0].mxu0
      %v1432 = vadd.f32 %v1211, %v1431
      %v1433 = vpop.f32.mrb[0].mxu0
      %v1434 = vpop.f32.mrb[0].mxu0
      %v1435 = vadd.f32 %v1211, %v1434
      %v1436 = vpop.f32.mrb[0].mxu0
      %1437 = vmatprep.mubr.bf16.mxu0 0
      %1438 = vmatmul.mubr.bf16.gmra.mrb[0].mxu0 %v1176
      %v1439 = vpop.f32.mrb[0].mxu0
      %v1440 = vadd.f32 %v1211, %v1439
      %v1441 = vpop.f32.mrb[0].mxu0
      %v1442 = vpop.f32.mrb[0].mxu0
      %v1443 = vadd.f32 %v1211, %v1442
      %v1444 = vpop.f32.mrb[0].mxu0
      %1445 = vmatprep.mubr.bf16.mxu0 0
      %1446 = vmatmul.mubr.bf16.gmra.mrb[0].mxu0 %v1177
      %v1447 = vpop.f32.mrb[0].mxu0
      %v1448 = vadd.f32 %v1211, %v1447
      %v1449 = vpop.f32.mrb[0].mxu0
      %v1450 = vpop.f32.mrb[0].mxu0
      %v1451 = vadd.f32 %v1211, %v1450
      %v1452 = vpop.f32.mrb[0].mxu0
      %1453 = vmatprep.mubr.bf16.mxu0 0
      %1454 = vmatmul.mubr.bf16.gmra.mrb[0].mxu0 %v1178
      %v1455 = vpop.f32.mrb[0].mxu0
      %v1456 = vadd.f32 %v1211, %v1455
      %v1457 = vpop.f32.mrb[0].mxu0
      %v1458 = vpop.f32.mrb[0].mxu0
      %v1459 = vadd.f32 %v1211, %v1458
      %v1460 = vpop.f32.mrb[0].mxu0
      %1461 = vmatprep.mubr.bf16.mxu0 0
      %1462 = vmatmul.mubr.bf16.gmra.mrb[0].mxu0 %v1179
      %v1463 = vpop.f32.mrb[0].mxu0
      %v1464 = vadd.f32 %v1211, %v1463
      %v1465 = vpop.f32.mrb[0].mxu0
      %v1466 = vpop.f32.mrb[0].mxu0
      %v1467 = vadd.f32 %v1211, %v1466
      %v1468 = vpop.f32.mrb[0].mxu0
      %1469 = vmatprep.mubr.bf16.mxu0 0
      %1470 = vmatmul.mubr.bf16.gmra.mrb[0].mxu0 %v1180
      %v1471 = vpop.f32.mrb[0].mxu0
      %v1472 = vadd.f32 %v1211, %v1471
      %v1473 = vpop.f32.mrb[0].mxu0
      %v1474 = vpop.f32.mrb[0].mxu0
      %v1475 = vadd.f32 %v1211, %v1474
      %v1476 = vpop.f32.mrb[0].mxu0
      %1477 = vmatprep.mubr.bf16.mxu0 0
      %1478 = vmatmul.mubr.bf16.gmra.mrb[0].mxu0 %v1181
      %v1479 = vpop.f32.mrb[0].mxu0
      %v1480 = vadd.f32 %v1211, %v1479
      %v1481 = vpop.f32.mrb[0].mxu0
      %v1482 = vpop.f32.mrb[0].mxu0
      %v1483 = vadd.f32 %v1211, %v1482
      %v1484 = vpop.f32.mrb[0].mxu0
      %1485 = vmatprep.mubr.bf16.mxu0 0
      %1486 = vmatmul.mubr.bf16.gmra.mrb[0].mxu0 %v1182
      %v1487 = vpop.f32.mrb[0].mxu0
      %v1488 = vadd.f32 %v1211, %v1487
      %v1489 = vpop.f32.mrb[0].mxu0
      %v1490 = vpop.f32.mrb[0].mxu0
      %v1491 = vadd.f32 %v1211, %v1490
      %v1492 = vpop.f32.mrb[0].mxu0
      %1493 = vmatprep.mubr.bf16.mxu0 0
      %1494 = vmatmul.mubr.bf16.gmra.mrb[0].mxu0 %v1183
      %v1495 = vpop.f32.mrb[0].mxu0
      %v1496 = vadd.f32 %v1211, %v1495
      %v1497 = vpop.f32.mrb[0].mxu0
      %v1498 = vpop.f32.mrb[0].mxu0
      %v1499 = vadd.f32 %v1211, %v1498
      %v1500 = vpop.f32.mrb[0].mxu0
      %1501 = vmatprep.mubr.bf16.mxu0 0
      %1502 = vmatmul.mubr.bf16.gmra.mrb[0].mxu0 %v1184
      %v1503 = vpop.f32.mrb[0].mxu0
      %v1504 = vadd.f32 %v1211, %v1503
      %v1505 = vpop.f32.mrb[0].mxu0
      %v1506 = vpop.f32.mrb[0].mxu0
      %v1507 = vadd.f32 %v1211, %v1506
      %v1508 = vpop.f32.mrb[0].mxu0
      %1509 = vmatprep.mubr.bf16.mxu0 0
      %1510 = vmatmul.mubr.bf16.gmra.mrb[0].mxu0 %v1185
      %v1511 = vpop.f32.mrb[0].mxu0
      %v1512 = vadd.f32 %v1211, %v1511
      %v1513 = vpop.f32.mrb[0].mxu0
      %v1514 = vpop.f32.mrb[0].mxu0
      %v1515 = vadd.f32 %v1211, %v1514
      %v1516 = vpop.f32.mrb[0].mxu0
      %1517 = vmatprep.mubr.bf16.mxu0 0
      %1518 = vmatmul.mubr.bf16.gmra.mrb[0].mxu0 %v1186
      %v1519 = vpop.f32.mrb[0].mxu0
      %v1520 = vadd.f32 %v1211, %v1519
      %v1521 = vpop.f32.mrb[0].mxu0
      %v1522 = vpop.f32.mrb[0].mxu0
      %v1523 = vadd.f32 %v1211, %v1522
      %v1524 = vpop.f32.mrb[0].mxu0
      %1525 = vmatprep.mubr.bf16.mxu0 0
      %1526 = vmatmul.mubr.bf16.gmra.mrb[0].mxu0 %v1187
      %v1527 = vpop.f32.mrb[0].mxu0
      %v1528 = vadd.f32 %v1211, %v1527
      %v1529 = vpop.f32.mrb[0].mxu0
      %v1530 = vpop.f32.mrb[0].mxu0
      %v1531 = vadd.f32 %v1211, %v1530
      %v1532 = vpop.f32.mrb[0].mxu0
      %1533 = vmatprep.mubr.bf16.mxu0 0
      %1534 = vmatmul.mubr.bf16.gmra.mrb[0].mxu0 %v1188
      %v1535 = vpop.f32.mrb[0].mxu0
      %v1536 = vadd.f32 %v1211, %v1535
      %v1537 = vpop.f32.mrb[0].mxu0
      %v1538 = vpop.f32.mrb[0].mxu0
      %v1539 = vadd.f32 %v1211, %v1538
      %v1540 = vpop.f32.mrb[0].mxu0
      %1541 = vmatprep.mubr.bf16.mxu0 0
      %1542 = vmatmul.mubr.bf16.gmra.mrb[0].mxu0 %v1189
      %v1543 = vpop.f32.mrb[0].mxu0
      %v1544 = vadd.f32 %v1211, %v1543
      %v1545 = vpop.f32.mrb[0].mxu0
      %v1546 = vpop.f32.mrb[0].mxu0
      %v1547 = vadd.f32 %v1211, %v1546
      %v1548 = vpop.f32.mrb[0].mxu0
      %1549 = vdwg.mxu0
      %v1550 = vtanh.pop %v1296
      %v1551 = vtanh.pop %v1299
      %v1552 = vtanh.pop %v1304
      %v1553 = vtanh.pop %v1307
      %v1554 = vtanh.pop %v1312
      %v1555 = vtanh.pop %v1315
      %v1556 = vtanh.pop %v1320
      %v1557 = vtanh.pop %v1323
      %v1558 = vtanh.pop %v1328
      %v1559 = vtanh.pop %v1331
      %v1560 = vtanh.pop %v1336
      %v1561 = vtanh.pop %v1339
      %v1562 = vtanh.pop %v1344
      %v1563 = vtanh.pop %v1347
      %v1564 = vtanh.pop %v1352
      %v1565 = vtanh.pop %v1355
      %v1566 = vtanh.pop %v1360
      %v1567 = vtanh.pop %v1363
      %v1568 = vtanh.pop %v1368
      %v1569 = vtanh.pop %v1371
      %v1570 = vtanh.pop %v1376
      %v1571 = vtanh.pop %v1379
      %v1572 = vtanh.pop %v1384
      %v1573 = vtanh.pop %v1387
      %v1574 = vtanh.pop %v1392
      %v1575 = vtanh.pop %v1395
      %v1576 = vtanh.pop %v1400
      %v1577 = vtanh.pop %v1403
      %v1578 = vtanh.pop %v1408
      %v1579 = vtanh.pop %v1411
      %v1580 = vtanh.pop %v1416
      %v1581 = vtanh.pop %v1419
      %v1582 = vtanh.pop %v1424
      %v1583 = vtanh.pop %v1427
      %v1584 = vtanh.pop %v1432
      %v1585 = vtanh.pop %v1435
      %v1586 = vtanh.pop %v1440
      %v1587 = vtanh.pop %v1443
      %v1588 = vtanh.pop %v1448
      %v1589 = vtanh.pop %v1451
      %v1590 = vtanh.pop %v1456
      %v1591 = vtanh.pop %v1459
      %v1592 = vtanh.pop %v1464
      %v1593 = vtanh.pop %v1467
      %v1594 = vtanh.pop %v1472
      %v1595 = vtanh.pop %v1475
      %v1596 = vtanh.pop %v1480
      %v1597 = vtanh.pop %v1483
      %v1598 = vtanh.pop %v1488
      %v1599 = vtanh.pop %v1491
      %v1600 = vtanh.pop %v1496
      %v1601 = vtanh.pop %v1499
      %v1602 = vtanh.pop %v1504
      %v1603 = vtanh.pop %v1507
      %v1604 = vtanh.pop %v1512
      %v1605 = vtanh.pop %v1515
      %v1606 = vtanh.pop %v1520
      %v1607 = vtanh.pop %v1523
      %v1608 = vtanh.pop %v1528
      %v1609 = vtanh.pop %v1531
      %v1610 = vtanh.pop %v1536
      %v1611 = vtanh.pop %v1539
      %v1612 = vtanh.pop %v1544
      %v1613 = vtanh.pop %v1547
      %v1614 = vpack.c.bf16 %v1551, %v1550
      %v1615 = vpack.c.bf16 %v1553, %v1552
      %v1616 = vpack.c.bf16 %v1555, %v1554
      %v1617 = vpack.c.bf16 %v1557, %v1556
      %v1618 = vpack.c.bf16 %v1559, %v1558
      %v1619 = vpack.c.bf16 %v1561, %v1560
      %v1620 = vpack.c.bf16 %v1563, %v1562
      %v1621 = vpack.c.bf16 %v1565, %v1564
      %v1622 = vpack.c.bf16 %v1567, %v1566
      %v1623 = vpack.c.bf16 %v1569, %v1568
      %v1624 = vpack.c.bf16 %v1571, %v1570
      %v1625 = vpack.c.bf16 %v1573, %v1572
      %v1626 = vpack.c.bf16 %v1575, %v1574
      %v1627 = vpack.c.bf16 %v1577, %v1576
      %v1628 = vpack.c.bf16 %v1579, %v1578
      %v1629 = vpack.c.bf16 %v1581, %v1580
      %v1630 = vpack.c.bf16 %v1583, %v1582
      %v1631 = vpack.c.bf16 %v1585, %v1584
      %v1632 = vpack.c.bf16 %v1587, %v1586
      %v1633 = vpack.c.bf16 %v1589, %v1588
      %v1634 = vpack.c.bf16 %v1591, %v1590
      %v1635 = vpack.c.bf16 %v1593, %v1592
      %v1636 = vpack.c.bf16 %v1595, %v1594
      %v1637 = vpack.c.bf16 %v1597, %v1596
      %v1638 = vpack.c.bf16 %v1599, %v1598
      %v1639 = vpack.c.bf16 %v1601, %v1600
      %v1640 = vpack.c.bf16 %v1603, %v1602
      %v1641 = vpack.c.bf16 %v1605, %v1604
      %v1642 = vpack.c.bf16 %v1607, %v1606
      %v1643 = vpack.c.bf16 %v1609, %v1608
      %v1644 = vpack.c.bf16 %v1611, %v1610
      %v1645 = vpack.c.bf16 %v1613, %v1612
      %v1646 = vld [vmem:[%s5] sm:$0xf]
      %v1647 = vld [vmem:[%s5 + $0x4] sm:$0xf]
      %v1648 = vld [vmem:[%s5 + $0x8] sm:$0xf]
      %v1649 = vld [vmem:[%s5 + $0xc] sm:$0xf]
      %v1650 = vld [vmem:[%s5 + $0x10] sm:$0xf]
      %v1651 = vld [vmem:[%s5 + $0x14] sm:$0xf]
      %v1652 = vld [vmem:[%s5 + $0x18] sm:$0xf]
      %v1653 = vld [vmem:[%s5 + $0x1c] sm:$0xf]
      %v1654 = vld [vmem:[%s5 + $0x20] sm:$0xf]
      %v1655 = vld [vmem:[%s5 + $0x24] sm:$0xf]
      %v1656 = vld [vmem:[%s5 + $0x28] sm:$0xf]
      %v1657 = vld [vmem:[%s5 + $0x2c] sm:$0xf]
      %v1658 = vld [vmem:[%s5 + $0x30] sm:$0xf]
      %v1659 = vld [vmem:[%s5 + $0x34] sm:$0xf]
      %v1660 = vld [vmem:[%s5 + $0x38] sm:$0xf]
      %v1661 = vld [vmem:[%s5 + $0x3c] sm:$0xf]
      %v1662 = vld [vmem:[%s6] sm:$0x1]
      %v1664 = vlaneseq
      %v1665 = vshrl.u32 %v1664, 7
      %v1666 = vsub.s32 0, %v1665
      %v1667 = vrot.slane %v1662, %v1666
      %v1685 = vunpack.c.l.b16 %v1646
      %v1686 = vunpack.c.l.b16 %v1647
      %v1687 = vunpack.c.l.b16 %v1648
      %v1688 = vunpack.c.l.b16 %v1649
      %v1689 = vunpack.c.l.b16 %v1650
      %v1690 = vunpack.c.l.b16 %v1651
      %v1691 = vunpack.c.l.b16 %v1652
      %v1692 = vunpack.c.l.b16 %v1653
      %v1693 = vunpack.c.l.b16 %v1654
      %v1694 = vunpack.c.l.b16 %v1655
      %v1695 = vunpack.c.l.b16 %v1656
      %v1696 = vunpack.c.l.b16 %v1657
      %v1697 = vunpack.c.l.b16 %v1658
      %v1698 = vunpack.c.l.b16 %v1659
      %v1699 = vunpack.c.l.b16 %v1660
      %v1700 = vunpack.c.l.b16 %v1661
      %v1701 = vpack.c.b16 %v1686, %v1685
      %v1702 = vpack.c.b16 %v1688, %v1687
      %v1703 = vpack.c.b16 %v1690, %v1689
      %v1704 = vpack.c.b16 %v1692, %v1691
      %v1705 = vpack.c.b16 %v1694, %v1693
      %v1706 = vpack.c.b16 %v1696, %v1695
      %v1707 = vpack.c.b16 %v1698, %v1697
      %v1708 = vpack.c.b16 %v1700, %v1699
      %1717 = vmatprep.subr.bf16.mxu0 0
      %1718 = vmatpush1.bf16.msra.mxu0 %v1701
      %1719 = vmatprep.subr.bf16.mxu0 0
      %1720 = vmatpush1.bf16.msra.mxu0 %v1702
      %1721 = vmatprep.subr.bf16.mxu0 0
      %1722 = vmatpush1.bf16.msra.mxu0 %v1703
      %1723 = vmatprep.subr.bf16.mxu0 0
      %1724 = vmatpush1.bf16.msra.mxu0 %v1704
      %1725 = vmatprep.subr.bf16.mxu0 0
      %1726 = vmatpush1.bf16.msra.mxu0 %v1705
      %1727 = vmatprep.subr.bf16.mxu0 0
      %1728 = vmatpush1.bf16.msra.mxu0 %v1706
      %1729 = vmatprep.subr.bf16.mxu0 0
      %1730 = vmatpush1.bf16.msra.mxu0 %v1707
      %1731 = vmatprep.subr.bf16.mxu0 0
      %1732 = vmatpush1.bf16.msra.mxu0 %v1708
      %1733 = vmatprep.subr.bf16.mxu0 0
      %1734 = vmatpush1.bf16.msra.mxu0 0
      %1735 = vmatprep.subr.bf16.mxu0 0
      %1736 = vmatpush1.bf16.msra.mxu0 0
      %1737 = vmatprep.subr.bf16.mxu0 0
      %1738 = vmatpush1.bf16.msra.mxu0 0
      %1739 = vmatprep.subr.bf16.mxu0 0
      %1740 = vmatpush1.bf16.msra.mxu0 0
      %1741 = vmatprep.subr.bf16.mxu0 0
      %1742 = vmatpush1.bf16.msra.mxu0 0
      %1743 = vmatprep.subr.bf16.mxu0 0
      %1744 = vmatpush1.bf16.msra.mxu0 0
      %1745 = vmatprep.subr.bf16.mxu0 0
      %1746 = vmatpush1.bf16.msra.mxu0 0
      %1747 = vmatprep.subr.bf16.mxu0 0
      %1748 = vmatpush1.bf16.msra.mxu0 0
      %1749 = vmatprep.mubr.bf16.mxu0 0
      %1750 = vmatmul.mubr.bf16.gmra.mrb[0].mxu0 %v1614
      %v1751 = vpop.f32.mrb[0].mxu0
      %v1752 = vadd.f32 %v1667, %v1751
      %v1753 = vpop.f32.mrb[0].mxu0
      %v1754 = vpop.f32.mrb[0].mxu0
      %v1755 = vadd.f32 %v1667, %v1754
      %v1756 = vpop.f32.mrb[0].mxu0
      %1757 = vmatprep.mubr.bf16.mxu0 0
      %1758 = vmatmul.mubr.bf16.gmra.mrb[0].mxu0 %v1615
      %v1759 = vpop.f32.mrb[0].mxu0
      %v1760 = vadd.f32 %v1667, %v1759
      %v1761 = vpop.f32.mrb[0].mxu0
      %v1762 = vpop.f32.mrb[0].mxu0
      %v1763 = vadd.f32 %v1667, %v1762
      %v1764 = vpop.f32.mrb[0].mxu0
      %1765 = vmatprep.mubr.bf16.mxu0 0
      %1766 = vmatmul.mubr.bf16.gmra.mrb[0].mxu0 %v1616
      %v1767 = vpop.f32.mrb[0].mxu0
      %v1768 = vadd.f32 %v1667, %v1767
      %v1769 = vpop.f32.mrb[0].mxu0
      %v1770 = vpop.f32.mrb[0].mxu0
      %v1771 = vadd.f32 %v1667, %v1770
      %v1772 = vpop.f32.mrb[0].mxu0
      %1773 = vmatprep.mubr.bf16.mxu0 0
      %1774 = vmatmul.mubr.bf16.gmra.mrb[0].mxu0 %v1617
      %v1775 = vpop.f32.mrb[0].mxu0
      %v1776 = vadd.f32 %v1667, %v1775
      %v1777 = vpop.f32.mrb[0].mxu0
      %v1778 = vpop.f32.mrb[0].mxu0
      %v1779 = vadd.f32 %v1667, %v1778
      %v1780 = vpop.f32.mrb[0].mxu0
      %1781 = vmatprep.mubr.bf16.mxu0 0
      %1782 = vmatmul.mubr.bf16.gmra.mrb[0].mxu0 %v1618
      %v1783 = vpop.f32.mrb[0].mxu0
      %v1784 = vadd.f32 %v1667, %v1783
      %v1785 = vpop.f32.mrb[0].mxu0
      %v1786 = vpop.f32.mrb[0].mxu0
      %v1787 = vadd.f32 %v1667, %v1786
      %v1788 = vpop.f32.mrb[0].mxu0
      %1789 = vmatprep.mubr.bf16.mxu0 0
      %1790 = vmatmul.mubr.bf16.gmra.mrb[0].mxu0 %v1619
      %v1791 = vpop.f32.mrb[0].mxu0
      %v1792 = vadd.f32 %v1667, %v1791
      %v1793 = vpop.f32.mrb[0].mxu0
      %v1794 = vpop.f32.mrb[0].mxu0
      %v1795 = vadd.f32 %v1667, %v1794
      %v1796 = vpop.f32.mrb[0].mxu0
      %1797 = vmatprep.mubr.bf16.mxu0 0
      %1798 = vmatmul.mubr.bf16.gmra.mrb[0].mxu0 %v1620
      %v1799 = vpop.f32.mrb[0].mxu0
      %v1800 = vadd.f32 %v1667, %v1799
      %v1801 = vpop.f32.mrb[0].mxu0
      %v1802 = vpop.f32.mrb[0].mxu0
      %v1803 = vadd.f32 %v1667, %v1802
      %v1804 = vpop.f32.mrb[0].mxu0
      %1805 = vmatprep.mubr.bf16.mxu0 0
      %1806 = vmatmul.mubr.bf16.gmra.mrb[0].mxu0 %v1621
      %v1807 = vpop.f32.mrb[0].mxu0
      %v1808 = vadd.f32 %v1667, %v1807
      %v1809 = vpop.f32.mrb[0].mxu0
      %v1810 = vpop.f32.mrb[0].mxu0
      %v1811 = vadd.f32 %v1667, %v1810
      %v1812 = vpop.f32.mrb[0].mxu0
      %1813 = vmatprep.mubr.bf16.mxu0 0
      %1814 = vmatmul.mubr.bf16.gmra.mrb[0].mxu0 %v1622
      %v1815 = vpop.f32.mrb[0].mxu0
      %v1816 = vadd.f32 %v1667, %v1815
      %v1817 = vpop.f32.mrb[0].mxu0
      %v1818 = vpop.f32.mrb[0].mxu0
      %v1819 = vadd.f32 %v1667, %v1818
      %v1820 = vpop.f32.mrb[0].mxu0
      %1821 = vmatprep.mubr.bf16.mxu0 0
      %1822 = vmatmul.mubr.bf16.gmra.mrb[0].mxu0 %v1623
      %v1823 = vpop.f32.mrb[0].mxu0
      %v1824 = vadd.f32 %v1667, %v1823
      %v1825 = vpop.f32.mrb[0].mxu0
      %v1826 = vpop.f32.mrb[0].mxu0
      %v1827 = vadd.f32 %v1667, %v1826
      %v1828 = vpop.f32.mrb[0].mxu0
      %1829 = vmatprep.mubr.bf16.mxu0 0
      %1830 = vmatmul.mubr.bf16.gmra.mrb[0].mxu0 %v1624
      %v1831 = vpop.f32.mrb[0].mxu0
      %v1832 = vadd.f32 %v1667, %v1831
      %v1833 = vpop.f32.mrb[0].mxu0
      %v1834 = vpop.f32.mrb[0].mxu0
      %v1835 = vadd.f32 %v1667, %v1834
      %v1836 = vpop.f32.mrb[0].mxu0
      %1837 = vmatprep.mubr.bf16.mxu0 0
      %1838 = vmatmul.mubr.bf16.gmra.mrb[0].mxu0 %v1625
      %v1839 = vpop.f32.mrb[0].mxu0
      %v1840 = vadd.f32 %v1667, %v1839
      %v1841 = vpop.f32.mrb[0].mxu0
      %v1842 = vpop.f32.mrb[0].mxu0
      %v1843 = vadd.f32 %v1667, %v1842
      %v1844 = vpop.f32.mrb[0].mxu0
      %1845 = vmatprep.mubr.bf16.mxu0 0
      %1846 = vmatmul.mubr.bf16.gmra.mrb[0].mxu0 %v1626
      %v1847 = vpop.f32.mrb[0].mxu0
      %v1848 = vadd.f32 %v1667, %v1847
      %v1849 = vpop.f32.mrb[0].mxu0
      %v1850 = vpop.f32.mrb[0].mxu0
      %v1851 = vadd.f32 %v1667, %v1850
      %v1852 = vpop.f32.mrb[0].mxu0
      %1853 = vmatprep.mubr.bf16.mxu0 0
      %1854 = vmatmul.mubr.bf16.gmra.mrb[0].mxu0 %v1627
      %v1855 = vpop.f32.mrb[0].mxu0
      %v1856 = vadd.f32 %v1667, %v1855
      %v1857 = vpop.f32.mrb[0].mxu0
      %v1858 = vpop.f32.mrb[0].mxu0
      %v1859 = vadd.f32 %v1667, %v1858
      %v1860 = vpop.f32.mrb[0].mxu0
      %1861 = vmatprep.mubr.bf16.mxu0 0
      %1862 = vmatmul.mubr.bf16.gmra.mrb[0].mxu0 %v1628
      %v1863 = vpop.f32.mrb[0].mxu0
      %v1864 = vadd.f32 %v1667, %v1863
      %v1865 = vpop.f32.mrb[0].mxu0
      %v1866 = vpop.f32.mrb[0].mxu0
      %v1867 = vadd.f32 %v1667, %v1866
      %v1868 = vpop.f32.mrb[0].mxu0
      %1869 = vmatprep.mubr.bf16.mxu0 0
      %1870 = vmatmul.mubr.bf16.gmra.mrb[0].mxu0 %v1629
      %v1871 = vpop.f32.mrb[0].mxu0
      %v1872 = vadd.f32 %v1667, %v1871
      %v1873 = vpop.f32.mrb[0].mxu0
      %v1874 = vpop.f32.mrb[0].mxu0
      %v1875 = vadd.f32 %v1667, %v1874
      %v1876 = vpop.f32.mrb[0].mxu0
      %1877 = vmatprep.mubr.bf16.mxu0 0
      %1878 = vmatmul.mubr.bf16.gmra.mrb[0].mxu0 %v1630
      %v1879 = vpop.f32.mrb[0].mxu0
      %v1880 = vadd.f32 %v1667, %v1879
      %v1881 = vpop.f32.mrb[0].mxu0
      %v1882 = vpop.f32.mrb[0].mxu0
      %v1883 = vadd.f32 %v1667, %v1882
      %v1884 = vpop.f32.mrb[0].mxu0
      %1885 = vmatprep.mubr.bf16.mxu0 0
      %1886 = vmatmul.mubr.bf16.gmra.mrb[0].mxu0 %v1631
      %v1887 = vpop.f32.mrb[0].mxu0
      %v1888 = vadd.f32 %v1667, %v1887
      %v1889 = vpop.f32.mrb[0].mxu0
      %v1890 = vpop.f32.mrb[0].mxu0
      %v1891 = vadd.f32 %v1667, %v1890
      %v1892 = vpop.f32.mrb[0].mxu0
      %1893 = vmatprep.mubr.bf16.mxu0 0
      %1894 = vmatmul.mubr.bf16.gmra.mrb[0].mxu0 %v1632
      %v1895 = vpop.f32.mrb[0].mxu0
      %v1896 = vadd.f32 %v1667, %v1895
      %v1897 = vpop.f32.mrb[0].mxu0
      %v1898 = vpop.f32.mrb[0].mxu0
      %v1899 = vadd.f32 %v1667, %v1898
      %v1900 = vpop.f32.mrb[0].mxu0
      %1901 = vmatprep.mubr.bf16.mxu0 0
      %1902 = vmatmul.mubr.bf16.gmra.mrb[0].mxu0 %v1633
      %v1903 = vpop.f32.mrb[0].mxu0
      %v1904 = vadd.f32 %v1667, %v1903
      %v1905 = vpop.f32.mrb[0].mxu0
      %v1906 = vpop.f32.mrb[0].mxu0
      %v1907 = vadd.f32 %v1667, %v1906
      %v1908 = vpop.f32.mrb[0].mxu0
      %1909 = vmatprep.mubr.bf16.mxu0 0
      %1910 = vmatmul.mubr.bf16.gmra.mrb[0].mxu0 %v1634
      %v1911 = vpop.f32.mrb[0].mxu0
      %v1912 = vadd.f32 %v1667, %v1911
      %v1913 = vpop.f32.mrb[0].mxu0
      %v1914 = vpop.f32.mrb[0].mxu0
      %v1915 = vadd.f32 %v1667, %v1914
      %v1916 = vpop.f32.mrb[0].mxu0
      %1917 = vmatprep.mubr.bf16.mxu0 0
      %1918 = vmatmul.mubr.bf16.gmra.mrb[0].mxu0 %v1635
      %v1919 = vpop.f32.mrb[0].mxu0
      %v1920 = vadd.f32 %v1667, %v1919
      %v1921 = vpop.f32.mrb[0].mxu0
      %v1922 = vpop.f32.mrb[0].mxu0
      %v1923 = vadd.f32 %v1667, %v1922
      %v1924 = vpop.f32.mrb[0].mxu0
      %1925 = vmatprep.mubr.bf16.mxu0 0
      %1926 = vmatmul.mubr.bf16.gmra.mrb[0].mxu0 %v1636
      %v1927 = vpop.f32.mrb[0].mxu0
      %v1928 = vadd.f32 %v1667, %v1927
      %v1929 = vpop.f32.mrb[0].mxu0
      %v1930 = vpop.f32.mrb[0].mxu0
      %v1931 = vadd.f32 %v1667, %v1930
      %v1932 = vpop.f32.mrb[0].mxu0
      %1933 = vmatprep.mubr.bf16.mxu0 0
      %1934 = vmatmul.mubr.bf16.gmra.mrb[0].mxu0 %v1637
      %v1935 = vpop.f32.mrb[0].mxu0
      %v1936 = vadd.f32 %v1667, %v1935
      %v1937 = vpop.f32.mrb[0].mxu0
      %v1938 = vpop.f32.mrb[0].mxu0
      %v1939 = vadd.f32 %v1667, %v1938
      %v1940 = vpop.f32.mrb[0].mxu0
      %1941 = vmatprep.mubr.bf16.mxu0 0
      %1942 = vmatmul.mubr.bf16.gmra.mrb[0].mxu0 %v1638
      %v1943 = vpop.f32.mrb[0].mxu0
      %v1944 = vadd.f32 %v1667, %v1943
      %v1945 = vpop.f32.mrb[0].mxu0
      %v1946 = vpop.f32.mrb[0].mxu0
      %v1947 = vadd.f32 %v1667, %v1946
      %v1948 = vpop.f32.mrb[0].mxu0
      %1949 = vmatprep.mubr.bf16.mxu0 0
      %1950 = vmatmul.mubr.bf16.gmra.mrb[0].mxu0 %v1639
      %v1951 = vpop.f32.mrb[0].mxu0
      %v1952 = vadd.f32 %v1667, %v1951
      %v1953 = vpop.f32.mrb[0].mxu0
      %v1954 = vpop.f32.mrb[0].mxu0
      %v1955 = vadd.f32 %v1667, %v1954
      %v1956 = vpop.f32.mrb[0].mxu0
      %1957 = vmatprep.mubr.bf16.mxu0 0
      %1958 = vmatmul.mubr.bf16.gmra.mrb[0].mxu0 %v1640
      %v1959 = vpop.f32.mrb[0].mxu0
      %v1960 = vadd.f32 %v1667, %v1959
      %v1961 = vpop.f32.mrb[0].mxu0
      %v1962 = vpop.f32.mrb[0].mxu0
      %v1963 = vadd.f32 %v1667, %v1962
      %v1964 = vpop.f32.mrb[0].mxu0
      %1965 = vmatprep.mubr.bf16.mxu0 0
      %1966 = vmatmul.mubr.bf16.gmra.mrb[0].mxu0 %v1641
      %v1967 = vpop.f32.mrb[0].mxu0
      %v1968 = vadd.f32 %v1667, %v1967
      %v1969 = vpop.f32.mrb[0].mxu0
      %v1970 = vpop.f32.mrb[0].mxu0
      %v1971 = vadd.f32 %v1667, %v1970
      %v1972 = vpop.f32.mrb[0].mxu0
      %1973 = vmatprep.mubr.bf16.mxu0 0
      %1974 = vmatmul.mubr.bf16.gmra.mrb[0].mxu0 %v1642
      %v1975 = vpop.f32.mrb[0].mxu0
      %v1976 = vadd.f32 %v1667, %v1975
      %v1977 = vpop.f32.mrb[0].mxu0
      %v1978 = vpop.f32.mrb[0].mxu0
      %v1979 = vadd.f32 %v1667, %v1978
      %v1980 = vpop.f32.mrb[0].mxu0
      %1981 = vmatprep.mubr.bf16.mxu0 0
      %1982 = vmatmul.mubr.bf16.gmra.mrb[0].mxu0 %v1643
      %v1983 = vpop.f32.mrb[0].mxu0
      %v1984 = vadd.f32 %v1667, %v1983
      %v1985 = vpop.f32.mrb[0].mxu0
      %v1986 = vpop.f32.mrb[0].mxu0
      %v1987 = vadd.f32 %v1667, %v1986
      %v1988 = vpop.f32.mrb[0].mxu0
      %1989 = vmatprep.mubr.bf16.mxu0 0
      %1990 = vmatmul.mubr.bf16.gmra.mrb[0].mxu0 %v1644
      %v1991 = vpop.f32.mrb[0].mxu0
      %v1992 = vadd.f32 %v1667, %v1991
      %v1993 = vpop.f32.mrb[0].mxu0
      %v1994 = vpop.f32.mrb[0].mxu0
      %v1995 = vadd.f32 %v1667, %v1994
      %v1996 = vpop.f32.mrb[0].mxu0
      %1997 = vmatprep.mubr.bf16.mxu0 0
      %1998 = vmatmul.mubr.bf16.gmra.mrb[0].mxu0 %v1645
      %v1999 = vpop.f32.mrb[0].mxu0
      %v2000 = vadd.f32 %v1667, %v1999
      %v2001 = vpop.f32.mrb[0].mxu0
      %v2002 = vpop.f32.mrb[0].mxu0
      %v2003 = vadd.f32 %v1667, %v2002
      %v2004 = vpop.f32.mrb[0].mxu0
      %2005 = vdwg.mxu0
      %2006 = vst [vmem:[%s283] sm:$0xff] %v1752
      %2007 = vst [vmem:[%s283 + $0x8] sm:$0xff] %v1755
      %2008 = vst [vmem:[%s283 + $0x10] sm:$0xff] %v1760
      %2009 = vst [vmem:[%s283 + $0x18] sm:$0xff] %v1763
      %2010 = vst [vmem:[%s283 + $0x20] sm:$0xff] %v1768
      %2011 = vst [vmem:[%s283 + $0x28] sm:$0xff] %v1771
      %2012 = vst [vmem:[%s283 + $0x30] sm:$0xff] %v1776
      %2013 = vst [vmem:[%s283 + $0x38] sm:$0xff] %v1779
      %2014 = vst [vmem:[%s283 + $0x40] sm:$0xff] %v1784
      %2015 = vst [vmem:[%s283 + $0x48] sm:$0xff] %v1787
      %2016 = vst [vmem:[%s283 + $0x50] sm:$0xff] %v1792
      %2017 = vst [vmem:[%s283 + $0x58] sm:$0xff] %v1795
      %2018 = vst [vmem:[%s283 + $0x60] sm:$0xff] %v1800
      %2019 = vst [vmem:[%s283 + $0x68] sm:$0xff] %v1803
      %2020 = vst [vmem:[%s283 + $0x70] sm:$0xff] %v1808
      %2021 = vst [vmem:[%s283 + $0x78] sm:$0xff] %v1811
      %2022 = vst [vmem:[%s283 + $0x80] sm:$0xff] %v1816
      %2023 = vst [vmem:[%s283 + $0x88] sm:$0xff] %v1819
      %2024 = vst [vmem:[%s283 + $0x90] sm:$0xff] %v1824
      %2025 = vst [vmem:[%s283 + $0x98] sm:$0xff] %v1827
      %2026 = vst [vmem:[%s283 + $0xa0] sm:$0xff] %v1832
      %2027 = vst [vmem:[%s283 + $0xa8] sm:$0xff] %v1835
      %2028 = vst [vmem:[%s283 + $0xb0] sm:$0xff] %v1840
      %2029 = vst [vmem:[%s283 + $0xb8] sm:$0xff] %v1843
      %2030 = vst [vmem:[%s283 + $0xc0] sm:$0xff] %v1848
      %2031 = vst [vmem:[%s283 + $0xc8] sm:$0xff] %v1851
      %2032 = vst [vmem:[%s283 + $0xd0] sm:$0xff] %v1856
      %2033 = vst [vmem:[%s283 + $0xd8] sm:$0xff] %v1859
      %2034 = vst [vmem:[%s283 + $0xe0] sm:$0xff] %v1864
      %2035 = vst [vmem:[%s283 + $0xe8] sm:$0xff] %v1867
      %2036 = vst [vmem:[%s283 + $0xf0] sm:$0xff] %v1872
      %2037 = vst [vmem:[%s283 + $0xf8] sm:$0xff] %v1875
      %2038 = vst [vmem:[%s283 + $0x100] sm:$0xff] %v1880
      %2039 = vst [vmem:[%s283 + $0x108] sm:$0xff] %v1883
      %2040 = vst [vmem:[%s283 + $0x110] sm:$0xff] %v1888
      %2041 = vst [vmem:[%s283 + $0x118] sm:$0xff] %v1891
      %2042 = vst [vmem:[%s283 + $0x120] sm:$0xff] %v1896
      %2043 = vst [vmem:[%s283 + $0x128] sm:$0xff] %v1899
      %2044 = vst [vmem:[%s283 + $0x130] sm:$0xff] %v1904
      %2045 = vst [vmem:[%s283 + $0x138] sm:$0xff] %v1907
      %2046 = vst [vmem:[%s283 + $0x140] sm:$0xff] %v1912
      %2047 = vst [vmem:[%s283 + $0x148] sm:$0xff] %v1915
      %2048 = vst [vmem:[%s283 + $0x150] sm:$0xff] %v1920
      %2049 = vst [vmem:[%s283 + $0x158] sm:$0xff] %v1923
      %2050 = vst [vmem:[%s283 + $0x160] sm:$0xff] %v1928
      %2051 = vst [vmem:[%s283 + $0x168] sm:$0xff] %v1931
      %2052 = vst [vmem:[%s283 + $0x170] sm:$0xff] %v1936
      %2053 = vst [vmem:[%s283 + $0x178] sm:$0xff] %v1939
      %2054 = vst [vmem:[%s283 + $0x180] sm:$0xff] %v1944
      %2055 = vst [vmem:[%s283 + $0x188] sm:$0xff] %v1947
      %2056 = vst [vmem:[%s283 + $0x190] sm:$0xff] %v1952
      %2057 = vst [vmem:[%s283 + $0x198] sm:$0xff] %v1955
      %2058 = vst [vmem:[%s283 + $0x1a0] sm:$0xff] %v1960
      %2059 = vst [vmem:[%s283 + $0x1a8] sm:$0xff] %v1963
      %2060 = vst [vmem:[%s283 + $0x1b0] sm:$0xff] %v1968
      %2061 = vst [vmem:[%s283 + $0x1b8] sm:$0xff] %v1971
      %2062 = vst [vmem:[%s283 + $0x1c0] sm:$0xff] %v1976
      %2063 = vst [vmem:[%s283 + $0x1c8] sm:$0xff] %v1979
      %2064 = vst [vmem:[%s283 + $0x1d0] sm:$0xff] %v1984
      %2065 = vst [vmem:[%s283 + $0x1d8] sm:$0xff] %v1987
      %2066 = vst [vmem:[%s283 + $0x1e0] sm:$0xff] %v1992
      %2067 = vst [vmem:[%s283 + $0x1e8] sm:$0xff] %v1995
      %2068 = vst [vmem:[%s283 + $0x1f0] sm:$0xff] %v2000
      %2069 = vst [vmem:[%s283 + $0x1f8] sm:$0xff] %v2003
      %s2070 = smul.u32 64, %s18
      %p2071 = scmp.lt.s32.totalorder %s2070, 127
      %s2072 = scalar_select %p2071, %s2070, 127
      %s2073 = smul.addr %s2072, 8
      %s2074 = scalar_lea.vmem %s7, %s2073
      // Predicated region
      $region49: #{neural_network_forward.1} parent=47 // pred_check
        %p2075 = pneg %p188
      $region50: #{neural_network_forward.1} parent=47 // pred_check_branch
        %2077 = sbr.rel (%p2075) target = $region52
      $region51: #{neural_network_forward.1} parent=47 // pred_region
        %s2078 = smul.u32 64, %s18
      $region52: #{neural_network_forward.1} parent=47 // pred_fallthru
        _
    $region48: #{neural_network_forward.1} parent=5 // pred_fallthru
      _
    %p2079 = scmp.le.s32.totalorder 2, %s13
    // Predicated region
    $region53: #{neural_network_forward.1} parent=5 // pred_check
      %p2080 = pneg %p2079
    $region54: #{neural_network_forward.1} parent=5 // pred_check_branch
      %2082 = sbr.rel (%p2080) target = $region56
    $region55: #{neural_network_forward.1} parent=5 // pred_region
      %s2083 = ssub.s32 %s13, 2
      // Predicated region
      $region57: #{neural_network_forward.1} parent=55 // pred_check
        %p2084 = pneg %p194
      $region58: #{neural_network_forward.1} parent=55 // pred_check_branch
        %2086 = sbr.rel (%p2084) target = $region60
      $region59: #{neural_network_forward.1} parent=55 // pred_region
        %s2087 = smul.u32 64, %s19
        %p2088 = scmp.lt.s32.totalorder %s2087, 127
        %s2089 = scalar_select %p2088, %s2087, 127
        %s2090 = smul.addr %s2089, 8
        %s2091 = scalar_lea.vmem %s7, %s2090
      $region60: #{neural_network_forward.1} parent=55 // pred_fallthru
        _
    $region56: #{neural_network_forward.1} parent=5 // pred_fallthru
      _
  $region6: #{neural_network_forward.1} parent=0 // loop_footer
    %s17 = sadd.s32 1, %s13
  $region7: #{neural_network_forward.1} parent=0 // loop_footer_branch
    %12 = sbr.rel target = $region3
  $region8: #{neural_network_forward.1} parent=0 // loop_exit
    _

</llo_original>
